<compile_context>
chip_gen: v7x
topology: tpu7x:2x2x1
jax: 0.10.0
libtpu: 0.0.40
codegen_flags: <defaults>
</compile_context>

<pallas_src>
import jax
import jax.numpy as jnp
from jax import lax
from jax.experimental import pallas as pl
from jax.experimental.pallas import tpu as pltpu

KW = 7      # conv kernel width
PAD = 3     # conv padding along W
EPS = 1e-3  # BatchNorm eps


def _relu_conv_bn_kernel(x_ref, w_ref, gamma_ref, beta_ref, out_ref, xpad_ref):
    # x_ref:     (W, NH, C)          unpadded input, W leading
    # w_ref:     (KW, Cin, Cout)
    # gamma_ref: (1, C)
    # beta_ref:  (1, C)
    # out_ref:   (W, NH, C)
    # xpad_ref:  (W + 2*PAD, NH, C)  VMEM scratch: zero-padded, ReLU'd input
    w_dim, nh, c = x_ref.shape

    # Build the zero-padded, ReLU'd activation once in VMEM (ReLU(0)=0, so the
    # explicit zeros in the pad planes are exactly what the conv padding needs).
    zeros_pad = jnp.zeros((PAD, nh, c), dtype=jnp.float32)
    xpad_ref[pl.ds(0, PAD), :, :] = zeros_pad
    xpad_ref[pl.ds(PAD + w_dim, PAD), :, :] = zeros_pad
    xpad_ref[pl.ds(PAD, w_dim), :, :] = jnp.maximum(x_ref[...], 0.0)

    # 7 shifted MXU matmuls.  Each tap's slice starts at an (NH, C)-plane
    # boundary along the leading axis, so the slice and the
    # (w, NH, C) -> (w*NH, C) reshape are layout-preserving (NH % 8 == 0):
    # no VMEM relayout copies per tap.
    acc = jnp.zeros((w_dim * nh, c), dtype=jnp.float32)
    for kw in range(KW):
        xs = xpad_ref[pl.ds(kw, w_dim), :, :].reshape(w_dim * nh, c)
        acc = acc + jnp.dot(xs, w_ref[kw], preferred_element_type=jnp.float32)

    # BatchNorm2d (training mode): biased batch stats over (N, H, W) per channel.
    # One-pass stats (sum & sum-of-squares), affine folded to scale/bias so the
    # per-element work is a single mul + add over the accumulator.
    inv_n = 1.0 / float(w_dim * nh)
    s1 = jnp.sum(acc, axis=0, keepdims=True)
    s2 = jnp.sum(acc * acc, axis=0, keepdims=True)
    mean = s1 * inv_n
    var = s2 * inv_n - mean * mean
    scale = gamma_ref[...] * lax.rsqrt(var + EPS)     # (1, C)
    bias = beta_ref[...] - mean * scale               # (1, C)
    out_ref[...] = (acc * scale + bias).reshape(w_dim, nh, c)


def relu_conv_bn(x_nchw, w_kw_ci_co, gamma, beta):
    """x_nchw: (N, C, H, W) f32.  Returns (N, C, H, W) f32."""
    n, c, h, w = x_nchw.shape
    nh = n * h
    # NCHW -> (W, N*H, C): W leading makes every conv tap a plane-aligned slice.
    # TODO(synk): these NCHW<->(W,NH,C) transposes are wrapper glue forced by the
    # module's NCHW interface; keeping activations in this layout end-to-end in the
    # surrounding model would remove the remaining HBM round-trips.
    x_wnhc = jnp.transpose(x_nchw, (3, 0, 2, 1)).reshape(w, nh, c)

    out = pl.pallas_call(
        _relu_conv_bn_kernel,
        out_shape=jax.ShapeDtypeStruct((w, nh, c), jnp.float32),
        in_specs=[
            pl.BlockSpec((w, nh, c), lambda: (0, 0, 0)),
            pl.BlockSpec((KW, c, c), lambda: (0, 0, 0)),
            pl.BlockSpec((1, c), lambda: (0, 0)),
            pl.BlockSpec((1, c), lambda: (0, 0)),
        ],
        out_specs=pl.BlockSpec((w, nh, c), lambda: (0, 0, 0)),
        scratch_shapes=[pltpu.VMEM((w + 2 * PAD, nh, c), jnp.float32)],
    )(x_wnhc, w_kw_ci_co, gamma, beta)

    # (W, N*H, C) -> NCHW
    return jnp.transpose(out.reshape(w, n, h, c), (1, 3, 2, 0))


def reference(x_nchw, w_kw_ci_co, gamma, beta):
    """Pure-JAX reference with PyTorch semantics (training-mode BN)."""
    x = jnp.maximum(x_nchw, 0.0)
    # (KW, Cin, Cout) -> OIHW = (Cout, Cin, 1, KW)
    w_oihw = jnp.transpose(w_kw_ci_co, (2, 1, 0))[:, :, None, :]
    y = lax.conv_general_dilated(
        x, w_oihw, window_strides=(1, 1), padding=((0, 0), (PAD, PAD)),
        dimension_numbers=("NCHW", "OIHW", "NCHW"))
    mean = jnp.mean(y, axis=(0, 2, 3), keepdims=True)
    var = jnp.mean((y - mean) ** 2, axis=(0, 2, 3), keepdims=True)
    g = gamma.reshape(1, -1, 1, 1)
    b = beta.reshape(1, -1, 1, 1)
    return (y - mean) * lax.rsqrt(var + EPS) * g + b


if __name__ == "__main__":
    key = jax.random.PRNGKey(0)
    kx, kw = jax.random.split(key)

    N, C, H, W = 1, 128, 12, 12   # shapes implied by the module
    x = jax.random.normal(kx, (N, C, H, W), dtype=jnp.float32)

    # Deterministic synthetic parameters.  Conv weight stored as (KW, Cin, Cout);
    # BN gamma=1, beta=0 (PyTorch defaults).
    fan_in = C * KW
    w = jax.random.normal(kw, (KW, C, C), dtype=jnp.float32) * (fan_in ** -0.5)
    gamma = jnp.ones((1, C), dtype=jnp.float32)
    beta = jnp.zeros((1, C), dtype=jnp.float32)

    out = relu_conv_bn(x, w, gamma, beta)
    out = jax.block_until_ready(out)

    ref = reference(x, w, gamma.reshape(-1), beta.reshape(-1))
    assert out.shape == (N, C, H, W)
    err = float(jnp.max(jnp.abs(out - ref)))
    assert jnp.allclose(out, ref, atol=1e-3, rtol=1e-3), err

    print("KERNEL_OK")
</pallas_src>

<mosaic_0001>
module attributes {stable_mosaic.version = 11 : i64} {
  func.func @_relu_conv_bn_kernel(%arg0: memref<12x12x128xf32, #tpu.memory_space<vmem>>, %arg1: memref<7x128x128xf32, #tpu.memory_space<vmem>>, %arg2: memref<1x128xf32, #tpu.memory_space<vmem>>, %arg3: memref<1x128xf32, #tpu.memory_space<vmem>>, %arg4: memref<12x12x128xf32, #tpu.memory_space<vmem>>, %arg5: memref<18x12x128xf32, #tpu.memory_space<vmem>>) attributes {dimension_semantics = [], scalar_prefetch = 0 : i64, scratch_operands = 1 : i64, tpu.core_type = #tpu.core_type<tc>} {
    %cst = arith.constant 0.000000e+00 : f32
    %0 = vector.broadcast %cst : f32 to vector<3x12x128xf32>
    %c0 = arith.constant 0 : index
    %c0_0 = arith.constant 0 : index
    %c0_1 = arith.constant 0 : index
    %1 = vector.load %arg5[%c0, %c0_0, %c0_1] : memref<18x12x128xf32, #tpu.memory_space<vmem>>, vector<3x12x128xf32>
    tpu.vector_store %arg5[%c0, %c0_0, %c0_1], %0 {strides = array<i32>} : memref<18x12x128xf32, #tpu.memory_space<vmem>>, vector<3x12x128xf32>,
    %c15 = arith.constant 15 : index
    %c0_2 = arith.constant 0 : index
    %c0_3 = arith.constant 0 : index
    %2 = vector.load %arg5[%c15, %c0_2, %c0_3] : memref<18x12x128xf32, #tpu.memory_space<vmem>>, vector<3x12x128xf32>
    tpu.vector_store %arg5[%c15, %c0_2, %c0_3], %0 {strides = array<i32>} : memref<18x12x128xf32, #tpu.memory_space<vmem>>, vector<3x12x128xf32>,
    %c0_4 = arith.constant 0 : index
    %c0_5 = arith.constant 0 : index
    %c0_6 = arith.constant 0 : index
    %3 = vector.load %arg0[%c0_4, %c0_5, %c0_6] : memref<12x12x128xf32, #tpu.memory_space<vmem>>, vector<12x12x128xf32>
    %cst_7 = arith.constant 0.000000e+00 : f32
    %4 = vector.broadcast %cst_7 : f32 to vector<12x12x128xf32>
    %5 = arith.maximumf %3, %4 : vector<12x12x128xf32>
    %c3 = arith.constant 3 : index
    %c0_8 = arith.constant 0 : index
    %c0_9 = arith.constant 0 : index
    %6 = vector.load %arg5[%c3, %c0_8, %c0_9] : memref<18x12x128xf32, #tpu.memory_space<vmem>>, vector<12x12x128xf32>
    tpu.vector_store %arg5[%c3, %c0_8, %c0_9], %5 {strides = array<i32>} : memref<18x12x128xf32, #tpu.memory_space<vmem>>, vector<12x12x128xf32>,
    %cst_10 = arith.constant 0.000000e+00 : f32
    %7 = vector.broadcast %cst_10 : f32 to vector<144x128xf32>
    %c0_11 = arith.constant 0 : index
    %c0_12 = arith.constant 0 : index
    %c0_13 = arith.constant 0 : index
    %8 = vector.load %arg5[%c0_11, %c0_12, %c0_13] : memref<18x12x128xf32, #tpu.memory_space<vmem>>, vector<12x12x128xf32>
    %9 = vector.shape_cast %8 : vector<12x12x128xf32> to vector<144x128xf32>
    %c0_14 = arith.constant 0 : index
    %c0_15 = arith.constant 0 : index
    %c0_16 = arith.constant 0 : index
    %10 = vector.load %arg1[%c0_14, %c0_15, %c0_16] : memref<7x128x128xf32, #tpu.memory_space<vmem>>, vector<1x128x128xf32>
    %11 = vector.shape_cast %10 : vector<1x128x128xf32> to vector<128x128xf32>
    %cst_17 = arith.constant dense<0.000000e+00> : vector<144x128xf32>
    %12 = tpu.matmul %9, %11, %cst_17 {dimension_numbers = #tpu.dot_dimension_numbers<[1], [0], [0], [1], [0, 0, 1, 1], [], []>} : vector<144x128xf32>, vector<128x128xf32>, vector<144x128xf32> -> vector<144x128xf32>
    %13 = arith.addf %7, %12 : vector<144x128xf32>
    %c1 = arith.constant 1 : index
    %c0_18 = arith.constant 0 : index
    %c0_19 = arith.constant 0 : index
    %14 = vector.load %arg5[%c1, %c0_18, %c0_19] : memref<18x12x128xf32, #tpu.memory_space<vmem>>, vector<12x12x128xf32>
    %15 = vector.shape_cast %14 : vector<12x12x128xf32> to vector<144x128xf32>
    %c1_20 = arith.constant 1 : index
    %c0_21 = arith.constant 0 : index
    %c0_22 = arith.constant 0 : index
    %16 = vector.load %arg1[%c1_20, %c0_21, %c0_22] : memref<7x128x128xf32, #tpu.memory_space<vmem>>, vector<1x128x128xf32>
    %17 = vector.shape_cast %16 : vector<1x128x128xf32> to vector<128x128xf32>
    %cst_23 = arith.constant dense<0.000000e+00> : vector<144x128xf32>
    %18 = tpu.matmul %15, %17, %cst_23 {dimension_numbers = #tpu.dot_dimension_numbers<[1], [0], [0], [1], [0, 0, 1, 1], [], []>} : vector<144x128xf32>, vector<128x128xf32>, vector<144x128xf32> -> vector<144x128xf32>
    %19 = arith.addf %13, %18 : vector<144x128xf32>
    %c2 = arith.constant 2 : index
    %c0_24 = arith.constant 0 : index
    %c0_25 = arith.constant 0 : index
    %20 = vector.load %arg5[%c2, %c0_24, %c0_25] : memref<18x12x128xf32, #tpu.memory_space<vmem>>, vector<12x12x128xf32>
    %21 = vector.shape_cast %20 : vector<12x12x128xf32> to vector<144x128xf32>
    %c2_26 = arith.constant 2 : index
    %c0_27 = arith.constant 0 : index
    %c0_28 = arith.constant 0 : index
    %22 = vector.load %arg1[%c2_26, %c0_27, %c0_28] : memref<7x128x128xf32, #tpu.memory_space<vmem>>, vector<1x128x128xf32>
    %23 = vector.shape_cast %22 : vector<1x128x128xf32> to vector<128x128xf32>
    %cst_29 = arith.constant dense<0.000000e+00> : vector<144x128xf32>
    %24 = tpu.matmul %21, %23, %cst_29 {dimension_numbers = #tpu.dot_dimension_numbers<[1], [0], [0], [1], [0, 0, 1, 1], [], []>} : vector<144x128xf32>, vector<128x128xf32>, vector<144x128xf32> -> vector<144x128xf32>
    %25 = arith.addf %19, %24 : vector<144x128xf32>
    %c3_30 = arith.constant 3 : index
    %c0_31 = arith.constant 0 : index
    %c0_32 = arith.constant 0 : index
    %26 = vector.load %arg5[%c3_30, %c0_31, %c0_32] : memref<18x12x128xf32, #tpu.memory_space<vmem>>, vector<12x12x128xf32>
    %27 = vector.shape_cast %26 : vector<12x12x128xf32> to vector<144x128xf32>
    %c3_33 = arith.constant 3 : index
    %c0_34 = arith.constant 0 : index
    %c0_35 = arith.constant 0 : index
    %28 = vector.load %arg1[%c3_33, %c0_34, %c0_35] : memref<7x128x128xf32, #tpu.memory_space<vmem>>, vector<1x128x128xf32>
    %29 = vector.shape_cast %28 : vector<1x128x128xf32> to vector<128x128xf32>
    %cst_36 = arith.constant dense<0.000000e+00> : vector<144x128xf32>
    %30 = tpu.matmul %27, %29, %cst_36 {dimension_numbers = #tpu.dot_dimension_numbers<[1], [0], [0], [1], [0, 0, 1, 1], [], []>} : vector<144x128xf32>, vector<128x128xf32>, vector<144x128xf32> -> vector<144x128xf32>
    %31 = arith.addf %25, %30 : vector<144x128xf32>
    %c4 = arith.constant 4 : index
    %c0_37 = arith.constant 0 : index
    %c0_38 = arith.constant 0 : index
    %32 = vector.load %arg5[%c4, %c0_37, %c0_38] : memref<18x12x128xf32, #tpu.memory_space<vmem>>, vector<12x12x128xf32>
    %33 = vector.shape_cast %32 : vector<12x12x128xf32> to vector<144x128xf32>
    %c4_39 = arith.constant 4 : index
    %c0_40 = arith.constant 0 : index
    %c0_41 = arith.constant 0 : index
    %34 = vector.load %arg1[%c4_39, %c0_40, %c0_41] : memref<7x128x128xf32, #tpu.memory_space<vmem>>, vector<1x128x128xf32>
    %35 = vector.shape_cast %34 : vector<1x128x128xf32> to vector<128x128xf32>
    %cst_42 = arith.constant dense<0.000000e+00> : vector<144x128xf32>
    %36 = tpu.matmul %33, %35, %cst_42 {dimension_numbers = #tpu.dot_dimension_numbers<[1], [0], [0], [1], [0, 0, 1, 1], [], []>} : vector<144x128xf32>, vector<128x128xf32>, vector<144x128xf32> -> vector<144x128xf32>
    %37 = arith.addf %31, %36 : vector<144x128xf32>
    %c5 = arith.constant 5 : index
    %c0_43 = arith.constant 0 : index
    %c0_44 = arith.constant 0 : index
    %38 = vector.load %arg5[%c5, %c0_43, %c0_44] : memref<18x12x128xf32, #tpu.memory_space<vmem>>, vector<12x12x128xf32>
    %39 = vector.shape_cast %38 : vector<12x12x128xf32> to vector<144x128xf32>
    %c5_45 = arith.constant 5 : index
    %c0_46 = arith.constant 0 : index
    %c0_47 = arith.constant 0 : index
    %40 = vector.load %arg1[%c5_45, %c0_46, %c0_47] : memref<7x128x128xf32, #tpu.memory_space<vmem>>, vector<1x128x128xf32>
    %41 = vector.shape_cast %40 : vector<1x128x128xf32> to vector<128x128xf32>
    %cst_48 = arith.constant dense<0.000000e+00> : vector<144x128xf32>
    %42 = tpu.matmul %39, %41, %cst_48 {dimension_numbers = #tpu.dot_dimension_numbers<[1], [0], [0], [1], [0, 0, 1, 1], [], []>} : vector<144x128xf32>, vector<128x128xf32>, vector<144x128xf32> -> vector<144x128xf32>
    %43 = arith.addf %37, %42 : vector<144x128xf32>
    %c6 = arith.constant 6 : index
    %c0_49 = arith.constant 0 : index
    %c0_50 = arith.constant 0 : index
    %44 = vector.load %arg5[%c6, %c0_49, %c0_50] : memref<18x12x128xf32, #tpu.memory_space<vmem>>, vector<12x12x128xf32>
    %45 = vector.shape_cast %44 : vector<12x12x128xf32> to vector<144x128xf32>
    %c6_51 = arith.constant 6 : index
    %c0_52 = arith.constant 0 : index
    %c0_53 = arith.constant 0 : index
    %46 = vector.load %arg1[%c6_51, %c0_52, %c0_53] : memref<7x128x128xf32, #tpu.memory_space<vmem>>, vector<1x128x128xf32>
    %47 = vector.shape_cast %46 : vector<1x128x128xf32> to vector<128x128xf32>
    %cst_54 = arith.constant dense<0.000000e+00> : vector<144x128xf32>
    %48 = tpu.matmul %45, %47, %cst_54 {dimension_numbers = #tpu.dot_dimension_numbers<[1], [0], [0], [1], [0, 0, 1, 1], [], []>} : vector<144x128xf32>, vector<128x128xf32>, vector<144x128xf32> -> vector<144x128xf32>
    %49 = arith.addf %43, %48 : vector<144x128xf32>
    %cst_55 = arith.constant dense<0.000000e+00> : vector<128xf32>
    %50 = vector.multi_reduction <add>, %49, %cst_55 [0] : vector<144x128xf32> to vector<128xf32>
    %51 = vector.shape_cast %50 : vector<128xf32> to vector<1x128xf32>
    %52 = arith.mulf %49, %49 : vector<144x128xf32>
    %cst_56 = arith.constant dense<0.000000e+00> : vector<128xf32>
    %53 = vector.multi_reduction <add>, %52, %cst_56 [0] : vector<144x128xf32> to vector<128xf32>
    %54 = vector.shape_cast %53 : vector<128xf32> to vector<1x128xf32>
    %cst_57 = arith.constant 0.0069444445 : f32
    %55 = vector.broadcast %cst_57 : f32 to vector<1x128xf32>
    %56 = arith.mulf %51, %55 : vector<1x128xf32>
    %cst_58 = arith.constant 0.0069444445 : f32
    %57 = vector.broadcast %cst_58 : f32 to vector<1x128xf32>
    %58 = arith.mulf %54, %57 : vector<1x128xf32>
    %59 = arith.mulf %56, %56 : vector<1x128xf32>
    %60 = arith.subf %58, %59 : vector<1x128xf32>
    %c0_59 = arith.constant 0 : index
    %c0_60 = arith.constant 0 : index
    %61 = vector.load %arg2[%c0_59, %c0_60] : memref<1x128xf32, #tpu.memory_space<vmem>>, vector<1x128xf32>
    %cst_61 = arith.constant 1.000000e-03 : f32
    %62 = vector.broadcast %cst_61 : f32 to vector<1x128xf32>
    %63 = arith.addf %60, %62 : vector<1x128xf32>
    %64 = math.rsqrt %63 : vector<1x128xf32>
    %65 = arith.mulf %61, %64 : vector<1x128xf32>
    %c0_62 = arith.constant 0 : index
    %c0_63 = arith.constant 0 : index
    %66 = vector.load %arg3[%c0_62, %c0_63] : memref<1x128xf32, #tpu.memory_space<vmem>>, vector<1x128xf32>
    %67 = arith.mulf %56, %65 : vector<1x128xf32>
    %68 = arith.subf %66, %67 : vector<1x128xf32>
    %69 = vector.broadcast %65 : vector<1x128xf32> to vector<144x128xf32>
    %70 = arith.mulf %49, %69 : vector<144x128xf32>
    %71 = vector.broadcast %68 : vector<1x128xf32> to vector<144x128xf32>
    %72 = arith.addf %70, %71 : vector<144x128xf32>
    %73 = vector.shape_cast %72 : vector<144x128xf32> to vector<12x12x128xf32>
    %c0_64 = arith.constant 0 : index
    %c0_65 = arith.constant 0 : index
    %c0_66 = arith.constant 0 : index
    %74 = vector.load %arg4[%c0_64, %c0_65, %c0_66] : memref<12x12x128xf32, #tpu.memory_space<vmem>>, vector<12x12x128xf32>
    tpu.vector_store %arg4[%c0_64, %c0_65, %c0_66], %73 {strides = array<i32>} : memref<12x12x128xf32, #tpu.memory_space<vmem>>, vector<12x12x128xf32>,
    return
  }
}

</mosaic_0001>

<llo_original>
// kernel: tpu_custom_call.1
$region0: #{tpu_custom_call.1}
  #allocation0 [shape = 'u32[]', space=smem, size = 0x4, offset = 0x4, fixed_abs, tag = 'smem constant byte address 0x4 - core index']
  #allocation1 [shape = 'u32[144,128]{1,0:T(1,128)}', space=vmem, size = 0x12000, scoped, tag = 'internal scratch']
  #allocation2 [shape = 'f32[18,12,128]{2,1,0:T(8,128)}', space=vmem, size = 0x24000, scoped, tag = 'scratch operand']
  %s0 = inlined_call_operand.hbm [shape: f32[12,12,128], index: 0, kind: input, shape index: {}]
  %s1 = inlined_call_operand.hbm [shape: f32[7,128,128], index: 1, kind: input, shape index: {}]
  %s2 = inlined_call_operand.vmem [shape: f32[1,128], index: 2, kind: input, shape index: {}]
  %s3 = inlined_call_operand.vmem [shape: f32[1,128], index: 3, kind: input, shape index: {}]
  %s4 = inlined_call_operand.hbm [shape: f32[12,12,128], index: 4, kind: output, shape index: {}]
  %s5 = sld [smem:[#allocation0]]
  $region34: #{tpu_custom_call.1} parent=0
    _
  %s7 = ssub.s32 1, %s5
  %s8 = scalar_select 0, %s7, %s5
  $region1: #{tpu_custom_call.1} parent=0
    #allocation3 [shape = 'u8[98304]{0}', space=vmem, size = 0x18000, scoped, tag = 'input window, operand 0, single buffered']
    #allocation4 [shape = 's32[1]{0}', space=sflag, size = 0x4, scoped, tag = 'scoped memory for tpu_custom_call.1']
    #allocation5 [shape = 's32[1]{0}', space=sflag, size = 0x4, scoped, tag = 'scoped memory for tpu_custom_call.1']
    #allocation6 [shape = 'u8[458752]{0}', space=vmem, size = 0x70000, scoped, tag = 'input window, operand 1, single buffered']
    #allocation7 [shape = 's32[1]{0}', space=sflag, size = 0x4, scoped, tag = 'scoped memory for tpu_custom_call.1']
    #allocation8 [shape = 'u8[98304]{0}', space=vmem, size = 0x18000, scoped, tag = 'output window, operand 0, single buffered']
    %9 = vsyncpa [#allocation4], 0
    %10 = vsyncpa [#allocation7], 0
    %11 = vsyncpa [#allocation5], 0
    // Predicated region
    $region2: #{tpu_custom_call.1} parent=1 // pred_check
      _
    $region3: #{tpu_custom_call.1} parent=1 // pred_check_branch
      %13 = sbr.rel (0) target = $region5
    $region4: #{tpu_custom_call.1} parent=1 // pred_region
      %s15 = ssub.s32 3072, 3072
      %16 = vsyncadd [#allocation4], %s15
      %s17 = sshll.u32 [#allocation3], 4
      %s18 = int_to_ptr.vmem [resolvable:$true] %s17
      %23 = dma.hbm_to_vmem [thread:$0]  %s0, 3072, %s18, [#allocation4], 128, 128, 8
    $region5: #{tpu_custom_call.1} parent=1 // pred_fallthru
      _
    // Predicated region
    $region6: #{tpu_custom_call.1} parent=1 // pred_check
      _
    $region7: #{tpu_custom_call.1} parent=1 // pred_check_branch
      %25 = sbr.rel (0) target = $region9
    $region8: #{tpu_custom_call.1} parent=1 // pred_region
      %s27 = ssub.s32 14336, 14336
      %28 = vsyncadd [#allocation7], %s27
      %s29 = sshll.u32 [#allocation6], 4
      %s30 = int_to_ptr.vmem [resolvable:$true] %s29
      %35 = dma.hbm_to_vmem [thread:$0]  %s1, 14336, %s30, [#allocation7], 128, 128, 8
    $region9: #{tpu_custom_call.1} parent=1 // pred_fallthru
      _
    // Predicated region
    $region10: #{tpu_custom_call.1} parent=1 // pred_check
      _
    $region11: #{tpu_custom_call.1} parent=1 // pred_check_branch
      %37 = sbr.rel (0) target = $region13
    $region12: #{tpu_custom_call.1} parent=1 // pred_region
      _
    $region13: #{tpu_custom_call.1} parent=1 // pred_fallthru
      _
    // Predicated region
    $region14: #{tpu_custom_call.1} parent=1 // pred_check
      _
    $region15: #{tpu_custom_call.1} parent=1 // pred_check_branch
      %39 = sbr.rel (0) target = $region17
    $region16: #{tpu_custom_call.1} parent=1 // pred_region
      _
    $region17: #{tpu_custom_call.1} parent=1 // pred_fallthru
      _
    // Predicated region
    $region18: #{tpu_custom_call.1} parent=1 // pred_check
      _
    $region19: #{tpu_custom_call.1} parent=1 // pred_check_branch
      %41 = sbr.rel (0) target = $region21
    $region20: #{tpu_custom_call.1} parent=1 // pred_region
      %42 = dma.done [#allocation4], 3072
    $region21: #{tpu_custom_call.1} parent=1 // pred_fallthru
      _
    // Predicated region
    $region22: #{tpu_custom_call.1} parent=1 // pred_check
      _
    $region23: #{tpu_custom_call.1} parent=1 // pred_check_branch
      %44 = sbr.rel (0) target = $region25
    $region24: #{tpu_custom_call.1} parent=1 // pred_region
      %45 = dma.done [#allocation7], 14336
    $region25: #{tpu_custom_call.1} parent=1 // pred_fallthru
      _
    %46 = vst [vmem:[#allocation2] sm:$0xff] 0.0
    %47 = vst [vmem:[#allocation2 + $0x8] sm:$0xf] 0.0
    %48 = vst [vmem:[#allocation2 + $0x10] sm:$0xff] 0.0
    %49 = vst [vmem:[#allocation2 + $0x18] sm:$0xf] 0.0
    %50 = vst [vmem:[#allocation2 + $0x20] sm:$0xff] 0.0
    %51 = vst [vmem:[#allocation2 + $0x28] sm:$0xf] 0.0
    %s52 = scalar_lea.vmem [#allocation2], 240
    %53 = vst [vmem:[%s52] sm:$0xff] 0.0
    %54 = vst [vmem:[%s52 + $0x8] sm:$0xf] 0.0
    %55 = vst [vmem:[%s52 + $0x10] sm:$0xff] 0.0
    %56 = vst [vmem:[%s52 + $0x18] sm:$0xf] 0.0
    %57 = vst [vmem:[%s52 + $0x20] sm:$0xff] 0.0
    %58 = vst [vmem:[%s52 + $0x28] sm:$0xf] 0.0
    %v59 = vld [vmem:[#allocation3] sm:$0xff]
    %v60 = vld [vmem:[#allocation3 + $0x8] sm:$0xf]
    %v61 = vld [vmem:[#allocation3 + $0x10] sm:$0xff]
    %v62 = vld [vmem:[#allocation3 + $0x18] sm:$0xf]
    %v63 = vld [vmem:[#allocation3 + $0x20] sm:$0xff]
    %v64 = vld [vmem:[#allocation3 + $0x28] sm:$0xf]
    %v65 = vld [vmem:[#allocation3 + $0x30] sm:$0xff]
    %v66 = vld [vmem:[#allocation3 + $0x38] sm:$0xf]
    %v67 = vld [vmem:[#allocation3 + $0x40] sm:$0xff]
    %v68 = vld [vmem:[#allocation3 + $0x48] sm:$0xf]
    %v69 = vld [vmem:[#allocation3 + $0x50] sm:$0xff]
    %v70 = vld [vmem:[#allocation3 + $0x58] sm:$0xf]
    %v71 = vld [vmem:[#allocation3 + $0x60] sm:$0xff]
    %v72 = vld [vmem:[#allocation3 + $0x68] sm:$0xf]
    %v73 = vld [vmem:[#allocation3 + $0x70] sm:$0xff]
    %v74 = vld [vmem:[#allocation3 + $0x78] sm:$0xf]
    %v75 = vld [vmem:[#allocation3 + $0x80] sm:$0xff]
    %v76 = vld [vmem:[#allocation3 + $0x88] sm:$0xf]
    %v77 = vld [vmem:[#allocation3 + $0x90] sm:$0xff]
    %v78 = vld [vmem:[#allocation3 + $0x98] sm:$0xf]
    %v79 = vld [vmem:[#allocation3 + $0xa0] sm:$0xff]
    %v80 = vld [vmem:[#allocation3 + $0xa8] sm:$0xf]
    %v81 = vld [vmem:[#allocation3 + $0xb0] sm:$0xff]
    %v82 = vld [vmem:[#allocation3 + $0xb8] sm:$0xf]
    %v83 = vmax.f32 %v59, 0.0
    %v84 = vmax.f32 %v60, 0.0
    %v85 = vmax.f32 %v61, 0.0
    %v86 = vmax.f32 %v62, 0.0
    %v87 = vmax.f32 %v63, 0.0
    %v88 = vmax.f32 %v64, 0.0
    %v89 = vmax.f32 %v65, 0.0
    %v90 = vmax.f32 %v66, 0.0
    %v91 = vmax.f32 %v67, 0.0
    %v92 = vmax.f32 %v68, 0.0
    %v93 = vmax.f32 %v69, 0.0
    %v94 = vmax.f32 %v70, 0.0
    %v95 = vmax.f32 %v71, 0.0
    %v96 = vmax.f32 %v72, 0.0
    %v97 = vmax.f32 %v73, 0.0
    %v98 = vmax.f32 %v74, 0.0
    %v99 = vmax.f32 %v75, 0.0
    %v100 = vmax.f32 %v76, 0.0
    %v101 = vmax.f32 %v77, 0.0
    %v102 = vmax.f32 %v78, 0.0
    %v103 = vmax.f32 %v79, 0.0
    %v104 = vmax.f32 %v80, 0.0
    %v105 = vmax.f32 %v81, 0.0
    %v106 = vmax.f32 %v82, 0.0
    %s107 = scalar_lea.vmem [#allocation2], 48
    %108 = vst [vmem:[%s107] sm:$0xff] %v83
    %109 = vst [vmem:[%s107 + $0x8] sm:$0xf] %v84
    %110 = vst [vmem:[%s107 + $0x10] sm:$0xff] %v85
    %111 = vst [vmem:[%s107 + $0x18] sm:$0xf] %v86
    %112 = vst [vmem:[%s107 + $0x20] sm:$0xff] %v87
    %113 = vst [vmem:[%s107 + $0x28] sm:$0xf] %v88
    %114 = vst [vmem:[%s107 + $0x30] sm:$0xff] %v89
    %115 = vst [vmem:[%s107 + $0x38] sm:$0xf] %v90
    %116 = vst [vmem:[%s107 + $0x40] sm:$0xff] %v91
    %117 = vst [vmem:[%s107 + $0x48] sm:$0xf] %v92
    %118 = vst [vmem:[%s107 + $0x50] sm:$0xff] %v93
    %119 = vst [vmem:[%s107 + $0x58] sm:$0xf] %v94
    %120 = vst [vmem:[%s107 + $0x60] sm:$0xff] %v95
    %121 = vst [vmem:[%s107 + $0x68] sm:$0xf] %v96
    %122 = vst [vmem:[%s107 + $0x70] sm:$0xff] %v97
    %123 = vst [vmem:[%s107 + $0x78] sm:$0xf] %v98
    %124 = vst [vmem:[%s107 + $0x80] sm:$0xff] %v99
    %125 = vst [vmem:[%s107 + $0x88] sm:$0xf] %v100
    %126 = vst [vmem:[%s107 + $0x90] sm:$0xff] %v101
    %127 = vst [vmem:[%s107 + $0x98] sm:$0xf] %v102
    %128 = vst [vmem:[%s107 + $0xa0] sm:$0xff] %v103
    %129 = vst [vmem:[%s107 + $0xa8] sm:$0xf] %v104
    %130 = vst [vmem:[%s107 + $0xb0] sm:$0xff] %v105
    %131 = vst [vmem:[%s107 + $0xb8] sm:$0xf] %v106
    %v132 = vld [vmem:[#allocation2] sm:$0xff]
    %v133 = vld [vmem:[#allocation2 + $0x8] sm:$0xf]
    %v134 = vld [vmem:[#allocation2 + $0x10] sm:$0xff]
    %v135 = vld [vmem:[#allocation2 + $0x18] sm:$0xf]
    %v136 = vld [vmem:[#allocation2 + $0x20] sm:$0xff]
    %v137 = vld [vmem:[#allocation2 + $0x28] sm:$0xf]
    %v138 = vld [vmem:[#allocation2 + $0x30] sm:$0xff]
    %v139 = vld [vmem:[#allocation2 + $0x38] sm:$0xf]
    %v140 = vld [vmem:[#allocation2 + $0x40] sm:$0xff]
    %v141 = vld [vmem:[#allocation2 + $0x48] sm:$0xf]
    %v142 = vld [vmem:[#allocation2 + $0x50] sm:$0xff]
    %v143 = vld [vmem:[#allocation2 + $0x58] sm:$0xf]
    %v144 = vld [vmem:[#allocation2 + $0x60] sm:$0xff]
    %v145 = vld [vmem:[#allocation2 + $0x68] sm:$0xf]
    %v146 = vld [vmem:[#allocation2 + $0x70] sm:$0xff]
    %v147 = vld [vmem:[#allocation2 + $0x78] sm:$0xf]
    %v148 = vld [vmem:[#allocation2 + $0x80] sm:$0xff]
    %v149 = vld [vmem:[#allocation2 + $0x88] sm:$0xf]
    %v150 = vld [vmem:[#allocation2 + $0x90] sm:$0xff]
    %v151 = vld [vmem:[#allocation2 + $0x98] sm:$0xf]
    %v152 = vld [vmem:[#allocation2 + $0xa0] sm:$0xff]
    %v153 = vld [vmem:[#allocation2 + $0xa8] sm:$0xf]
    %v154 = vld [vmem:[#allocation2 + $0xb0] sm:$0xff]
    %v155 = vld [vmem:[#allocation2 + $0xb8] sm:$0xf]
    %v180 = vcombine.high %v132, %v132
    %v181 = vcombine.high %v134, %v134
    %v182 = vcombine.high %v136, %v136
    %v183 = vcombine.high %v138, %v138
    %v184 = vcombine.high %v140, %v140
    %v185 = vcombine.high %v142, %v142
    %v186 = vcombine.high %v144, %v144
    %v187 = vcombine.high %v146, %v146
    %v188 = vcombine.high %v148, %v148
    %v189 = vcombine.high %v150, %v150
    %v190 = vcombine.high %v152, %v152
    %v191 = vcombine.high %v154, %v154
    %v192 = vld [vmem:[#allocation6] sm:$0xff]
    %v193 = vld [vmem:[#allocation6 + $0x8] sm:$0xff]
    %v194 = vld [vmem:[#allocation6 + $0x10] sm:$0xff]
    %v195 = vld [vmem:[#allocation6 + $0x18] sm:$0xff]
    %v196 = vld [vmem:[#allocation6 + $0x20] sm:$0xff]
    %v197 = vld [vmem:[#allocation6 + $0x28] sm:$0xff]
    %v198 = vld [vmem:[#allocation6 + $0x30] sm:$0xff]
    %v199 = vld [vmem:[#allocation6 + $0x38] sm:$0xff]
    %v200 = vld [vmem:[#allocation6 + $0x40] sm:$0xff]
    %v201 = vld [vmem:[#allocation6 + $0x48] sm:$0xff]
    %v202 = vld [vmem:[#allocation6 + $0x50] sm:$0xff]
    %v203 = vld [vmem:[#allocation6 + $0x58] sm:$0xff]
    %v204 = vld [vmem:[#allocation6 + $0x60] sm:$0xff]
    %v205 = vld [vmem:[#allocation6 + $0x68] sm:$0xff]
    %v206 = vld [vmem:[#allocation6 + $0x70] sm:$0xff]
    %v207 = vld [vmem:[#allocation6 + $0x78] sm:$0xff]
    %s208 = scalar_lea.vmem [#allocation2], 16
    %v209 = vld [vmem:[%s208] sm:$0xff]
    %v210 = vld [vmem:[%s208 + $0x8] sm:$0xf]
    %v211 = vld [vmem:[%s208 + $0x10] sm:$0xff]
    %v212 = vld [vmem:[%s208 + $0x18] sm:$0xf]
    %v213 = vld [vmem:[%s208 + $0x20] sm:$0xff]
    %v214 = vld [vmem:[%s208 + $0x28] sm:$0xf]
    %v215 = vld [vmem:[%s208 + $0x30] sm:$0xff]
    %v216 = vld [vmem:[%s208 + $0x38] sm:$0xf]
    %v217 = vld [vmem:[%s208 + $0x40] sm:$0xff]
    %v218 = vld [vmem:[%s208 + $0x48] sm:$0xf]
    %v219 = vld [vmem:[%s208 + $0x50] sm:$0xff]
    %v220 = vld [vmem:[%s208 + $0x58] sm:$0xf]
    %v221 = vld [vmem:[%s208 + $0x60] sm:$0xff]
    %v222 = vld [vmem:[%s208 + $0x68] sm:$0xf]
    %v223 = vld [vmem:[%s208 + $0x70] sm:$0xff]
    %v224 = vld [vmem:[%s208 + $0x78] sm:$0xf]
    %v225 = vld [vmem:[%s208 + $0x80] sm:$0xff]
    %v226 = vld [vmem:[%s208 + $0x88] sm:$0xf]
    %v227 = vld [vmem:[%s208 + $0x90] sm:$0xff]
    %v228 = vld [vmem:[%s208 + $0x98] sm:$0xf]
    %v229 = vld [vmem:[%s208 + $0xa0] sm:$0xff]
    %v230 = vld [vmem:[%s208 + $0xa8] sm:$0xf]
    %v231 = vld [vmem:[%s208 + $0xb0] sm:$0xff]
    %v232 = vld [vmem:[%s208 + $0xb8] sm:$0xf]
    %v257 = vcombine.high %v209, %v209
    %v258 = vcombine.high %v211, %v211
    %v259 = vcombine.high %v213, %v213
    %v260 = vcombine.high %v215, %v215
    %v261 = vcombine.high %v217, %v217
    %v262 = vcombine.high %v219, %v219
    %v263 = vcombine.high %v221, %v221
    %v264 = vcombine.high %v223, %v223
    %v265 = vcombine.high %v225, %v225
    %v266 = vcombine.high %v227, %v227
    %v267 = vcombine.high %v229, %v229
    %v268 = vcombine.high %v231, %v231
    %s269 = scalar_lea.vmem [#allocation6], 128
    %v270 = vld [vmem:[%s269] sm:$0xff]
    %v271 = vld [vmem:[%s269 + $0x8] sm:$0xff]
    %v272 = vld [vmem:[%s269 + $0x10] sm:$0xff]
    %v273 = vld [vmem:[%s269 + $0x18] sm:$0xff]
    %v274 = vld [vmem:[%s269 + $0x20] sm:$0xff]
    %v275 = vld [vmem:[%s269 + $0x28] sm:$0xff]
    %v276 = vld [vmem:[%s269 + $0x30] sm:$0xff]
    %v277 = vld [vmem:[%s269 + $0x38] sm:$0xff]
    %v278 = vld [vmem:[%s269 + $0x40] sm:$0xff]
    %v279 = vld [vmem:[%s269 + $0x48] sm:$0xff]
    %v280 = vld [vmem:[%s269 + $0x50] sm:$0xff]
    %v281 = vld [vmem:[%s269 + $0x58] sm:$0xff]
    %v282 = vld [vmem:[%s269 + $0x60] sm:$0xff]
    %v283 = vld [vmem:[%s269 + $0x68] sm:$0xff]
    %v284 = vld [vmem:[%s269 + $0x70] sm:$0xff]
    %v285 = vld [vmem:[%s269 + $0x78] sm:$0xff]
    %v286 = vcombine.low %v209, %v257
    %v287 = vcombine.low %v210, %v211
    %v288 = vcombine.low %v258, %v212
    %v289 = vcombine.low %v213, %v259
    %v290 = vcombine.low %v214, %v215
    %v291 = vcombine.low %v260, %v216
    %v292 = vcombine.low %v217, %v261
    %v293 = vcombine.low %v218, %v219
    %v294 = vcombine.low %v262, %v220
    %v295 = vcombine.low %v221, %v263
    %v296 = vcombine.low %v222, %v223
    %v297 = vcombine.low %v264, %v224
    %v298 = vcombine.low %v225, %v265
    %v299 = vcombine.low %v226, %v227
    %v300 = vcombine.low %v266, %v228
    %v301 = vcombine.low %v229, %v267
    %v302 = vcombine.low %v230, %v231
    %v303 = vcombine.low %v268, %v232
    %322 = vmatprep.subr.mxu0 0.0
    %323 = vmatpush1.msra.mxu0 %v270
    %324 = vmatprep.subr.mxu0 0.0
    %325 = vmatpush1.msra.mxu0 %v271
    %326 = vmatprep.subr.mxu0 0.0
    %327 = vmatpush1.msra.mxu0 %v272
    %328 = vmatprep.subr.mxu0 0.0
    %329 = vmatpush1.msra.mxu0 %v273
    %330 = vmatprep.subr.mxu0 0.0
    %331 = vmatpush1.msra.mxu0 %v274
    %332 = vmatprep.subr.mxu0 0.0
    %333 = vmatpush1.msra.mxu0 %v275
    %334 = vmatprep.subr.mxu0 0.0
    %335 = vmatpush1.msra.mxu0 %v276
    %336 = vmatprep.subr.mxu0 0.0
    %337 = vmatpush1.msra.mxu0 %v277
    %338 = vmatprep.subr.mxu0 0.0
    %339 = vmatpush1.msra.mxu0 %v278
    %340 = vmatprep.subr.mxu0 0.0
    %341 = vmatpush1.msra.mxu0 %v279
    %342 = vmatprep.subr.mxu0 0.0
    %343 = vmatpush1.msra.mxu0 %v280
    %344 = vmatprep.subr.mxu0 0.0
    %345 = vmatpush1.msra.mxu0 %v281
    %346 = vmatprep.subr.mxu0 0.0
    %347 = vmatpush1.msra.mxu0 %v282
    %348 = vmatprep.subr.mxu0 0.0
    %349 = vmatpush1.msra.mxu0 %v283
    %350 = vmatprep.subr.mxu0 0.0
    %351 = vmatpush1.msra.mxu0 %v284
    %352 = vmatprep.subr.mxu0 0.0
    %353 = vmatpush1.msra.mxu0 %v285
    %354 = vmatprep.subr.mxu0 0.0
    %355 = vmatpush1.msra.mxu0 0.0
    %356 = vmatprep.subr.mxu0 0.0
    %357 = vmatpush1.msra.mxu0 0.0
    %358 = vmatprep.subr.mxu0 0.0
    %359 = vmatpush1.msra.mxu0 0.0
    %360 = vmatprep.subr.mxu0 0.0
    %361 = vmatpush1.msra.mxu0 0.0
    %362 = vmatprep.subr.mxu0 0.0
    %363 = vmatpush1.msra.mxu0 0.0
    %364 = vmatprep.subr.mxu0 0.0
    %365 = vmatpush1.msra.mxu0 0.0
    %366 = vmatprep.subr.mxu0 0.0
    %367 = vmatpush1.msra.mxu0 0.0
    %368 = vmatprep.subr.mxu0 0.0
    %369 = vmatpush1.msra.mxu0 0.0
    %370 = vmatprep.subr.mxu0 0.0
    %371 = vmatpush1.msra.mxu0 0.0
    %372 = vmatprep.subr.mxu0 0.0
    %373 = vmatpush1.msra.mxu0 0.0
    %374 = vmatprep.subr.mxu0 0.0
    %375 = vmatpush1.msra.mxu0 0.0
    %376 = vmatprep.subr.mxu0 0.0
    %377 = vmatpush1.msra.mxu0 0.0
    %378 = vmatprep.subr.mxu0 0.0
    %379 = vmatpush1.msra.mxu0 0.0
    %380 = vmatprep.subr.mxu0 0.0
    %381 = vmatpush1.msra.mxu0 0.0
    %382 = vmatprep.subr.mxu0 0.0
    %383 = vmatpush1.msra.mxu0 0.0
    %384 = vmatprep.subr.mxu0 0.0
    %385 = vmatpush1.msra.mxu0 0.0
    %386 = vmatprep.mubr.f32.mxu0 0.0
    %387 = vmatmul.mubr.f32.gmra.mrb[0].mxu0 %v286
    %v388 = vpop.f32.mrb[0].mxu0
    %v389 = vadd.f32 0.0, %v388
    %v390 = vpop.f32.mrb[0].mxu0
    %391 = vmatprep.mubr.f32.mxu0 0.0
    %392 = vmatmul.mubr.f32.gmra.mrb[0].mxu0 %v287
    %v393 = vpop.f32.mrb[0].mxu0
    %v394 = vadd.f32 0.0, %v393
    %v395 = vpop.f32.mrb[0].mxu0
    %396 = vmatprep.mubr.f32.mxu0 0.0
    %397 = vmatmul.mubr.f32.gmra.mrb[0].mxu0 %v288
    %v398 = vpop.f32.mrb[0].mxu0
    %v399 = vadd.f32 0.0, %v398
    %v400 = vpop.f32.mrb[0].mxu0
    %401 = vmatprep.mubr.f32.mxu0 0.0
    %402 = vmatmul.mubr.f32.gmra.mrb[0].mxu0 %v289
    %v403 = vpop.f32.mrb[0].mxu0
    %v404 = vadd.f32 0.0, %v403
    %v405 = vpop.f32.mrb[0].mxu0
    %406 = vmatprep.mubr.f32.mxu0 0.0
    %407 = vmatmul.mubr.f32.gmra.mrb[0].mxu0 %v290
    %v408 = vpop.f32.mrb[0].mxu0
    %v409 = vadd.f32 0.0, %v408
    %v410 = vpop.f32.mrb[0].mxu0
    %411 = vmatprep.mubr.f32.mxu0 0.0
    %412 = vmatmul.mubr.f32.gmra.mrb[0].mxu0 %v291
    %v413 = vpop.f32.mrb[0].mxu0
    %v414 = vadd.f32 0.0, %v413
    %v415 = vpop.f32.mrb[0].mxu0
    %416 = vmatprep.mubr.f32.mxu0 0.0
    %417 = vmatmul.mubr.f32.gmra.mrb[0].mxu0 %v292
    %v418 = vpop.f32.mrb[0].mxu0
    %v419 = vadd.f32 0.0, %v418
    %v420 = vpop.f32.mrb[0].mxu0
    %421 = vmatprep.mubr.f32.mxu0 0.0
    %422 = vmatmul.mubr.f32.gmra.mrb[0].mxu0 %v293
    %v423 = vpop.f32.mrb[0].mxu0
    %v424 = vadd.f32 0.0, %v423
    %v425 = vpop.f32.mrb[0].mxu0
    %426 = vmatprep.mubr.f32.mxu0 0.0
    %427 = vmatmul.mubr.f32.gmra.mrb[0].mxu0 %v294
    %v428 = vpop.f32.mrb[0].mxu0
    %v429 = vadd.f32 0.0, %v428
    %v430 = vpop.f32.mrb[0].mxu0
    %431 = vmatprep.mubr.f32.mxu0 0.0
    %432 = vmatmul.mubr.f32.gmra.mrb[0].mxu0 %v295
    %v433 = vpop.f32.mrb[0].mxu0
    %v434 = vadd.f32 0.0, %v433
    %v435 = vpop.f32.mrb[0].mxu0
    %436 = vmatprep.mubr.f32.mxu0 0.0
    %437 = vmatmul.mubr.f32.gmra.mrb[0].mxu0 %v296
    %v438 = vpop.f32.mrb[0].mxu0
    %v439 = vadd.f32 0.0, %v438
    %v440 = vpop.f32.mrb[0].mxu0
    %441 = vmatprep.mubr.f32.mxu0 0.0
    %442 = vmatmul.mubr.f32.gmra.mrb[0].mxu0 %v297
    %v443 = vpop.f32.mrb[0].mxu0
    %v444 = vadd.f32 0.0, %v443
    %v445 = vpop.f32.mrb[0].mxu0
    %446 = vmatprep.mubr.f32.mxu0 0.0
    %447 = vmatmul.mubr.f32.gmra.mrb[0].mxu0 %v298
    %v448 = vpop.f32.mrb[0].mxu0
    %v449 = vadd.f32 0.0, %v448
    %v450 = vpop.f32.mrb[0].mxu0
    %451 = vmatprep.mubr.f32.mxu0 0.0
    %452 = vmatmul.mubr.f32.gmra.mrb[0].mxu0 %v299
    %v453 = vpop.f32.mrb[0].mxu0
    %v454 = vadd.f32 0.0, %v453
    %v455 = vpop.f32.mrb[0].mxu0
    %456 = vmatprep.mubr.f32.mxu0 0.0
    %457 = vmatmul.mubr.f32.gmra.mrb[0].mxu0 %v300
    %v458 = vpop.f32.mrb[0].mxu0
    %v459 = vadd.f32 0.0, %v458
    %v460 = vpop.f32.mrb[0].mxu0
    %461 = vmatprep.mubr.f32.mxu0 0.0
    %462 = vmatmul.mubr.f32.gmra.mrb[0].mxu0 %v301
    %v463 = vpop.f32.mrb[0].mxu0
    %v464 = vadd.f32 0.0, %v463
    %v465 = vpop.f32.mrb[0].mxu0
    %466 = vmatprep.mubr.f32.mxu0 0.0
    %467 = vmatmul.mubr.f32.gmra.mrb[0].mxu0 %v302
    %v468 = vpop.f32.mrb[0].mxu0
    %v469 = vadd.f32 0.0, %v468
    %v470 = vpop.f32.mrb[0].mxu0
    %471 = vmatprep.mubr.f32.mxu0 0.0
    %472 = vmatmul.mubr.f32.gmra.mrb[0].mxu0 %v303
    %v473 = vpop.f32.mrb[0].mxu0
    %v474 = vadd.f32 0.0, %v473
    %v475 = vpop.f32.mrb[0].mxu0
    %476 = vdwg.mxu0
    %v477 = vcombine.low %v132, %v180
    %v478 = vcombine.low %v133, %v134
    %v479 = vcombine.low %v181, %v135
    %v480 = vcombine.low %v136, %v182
    %v481 = vcombine.low %v137, %v138
    %v482 = vcombine.low %v183, %v139
    %v483 = vcombine.low %v140, %v184
    %v484 = vcombine.low %v141, %v142
    %v485 = vcombine.low %v185, %v143
    %v486 = vcombine.low %v144, %v186
    %v487 = vcombine.low %v145, %v146
    %v488 = vcombine.low %v187, %v147
    %v489 = vcombine.low %v148, %v188
    %v490 = vcombine.low %v149, %v150
    %v491 = vcombine.low %v189, %v151
    %v492 = vcombine.low %v152, %v190
    %v493 = vcombine.low %v153, %v154
    %v494 = vcombine.low %v191, %v155
    %513 = vmatprep.subr.mxu0 0.0
    %514 = vmatpush1.msra.mxu0 %v192
    %515 = vmatprep.subr.mxu0 0.0
    %516 = vmatpush1.msra.mxu0 %v193
    %517 = vmatprep.subr.mxu0 0.0
    %518 = vmatpush1.msra.mxu0 %v194
    %519 = vmatprep.subr.mxu0 0.0
    %520 = vmatpush1.msra.mxu0 %v195
    %521 = vmatprep.subr.mxu0 0.0
    %522 = vmatpush1.msra.mxu0 %v196
    %523 = vmatprep.subr.mxu0 0.0
    %524 = vmatpush1.msra.mxu0 %v197
    %525 = vmatprep.subr.mxu0 0.0
    %526 = vmatpush1.msra.mxu0 %v198
    %527 = vmatprep.subr.mxu0 0.0
    %528 = vmatpush1.msra.mxu0 %v199
    %529 = vmatprep.subr.mxu0 0.0
    %530 = vmatpush1.msra.mxu0 %v200
    %531 = vmatprep.subr.mxu0 0.0
    %532 = vmatpush1.msra.mxu0 %v201
    %533 = vmatprep.subr.mxu0 0.0
    %534 = vmatpush1.msra.mxu0 %v202
    %535 = vmatprep.subr.mxu0 0.0
    %536 = vmatpush1.msra.mxu0 %v203
    %537 = vmatprep.subr.mxu0 0.0
    %538 = vmatpush1.msra.mxu0 %v204
    %539 = vmatprep.subr.mxu0 0.0
    %540 = vmatpush1.msra.mxu0 %v205
    %541 = vmatprep.subr.mxu0 0.0
    %542 = vmatpush1.msra.mxu0 %v206
    %543 = vmatprep.subr.mxu0 0.0
    %544 = vmatpush1.msra.mxu0 %v207
    %545 = vmatprep.subr.mxu0 0.0
    %546 = vmatpush1.msra.mxu0 0.0
    %547 = vmatprep.subr.mxu0 0.0
    %548 = vmatpush1.msra.mxu0 0.0
    %549 = vmatprep.subr.mxu0 0.0
    %550 = vmatpush1.msra.mxu0 0.0
    %551 = vmatprep.subr.mxu0 0.0
    %552 = vmatpush1.msra.mxu0 0.0
    %553 = vmatprep.subr.mxu0 0.0
    %554 = vmatpush1.msra.mxu0 0.0
    %555 = vmatprep.subr.mxu0 0.0
    %556 = vmatpush1.msra.mxu0 0.0
    %557 = vmatprep.subr.mxu0 0.0
    %558 = vmatpush1.msra.mxu0 0.0
    %559 = vmatprep.subr.mxu0 0.0
    %560 = vmatpush1.msra.mxu0 0.0
    %561 = vmatprep.subr.mxu0 0.0
    %562 = vmatpush1.msra.mxu0 0.0
    %563 = vmatprep.subr.mxu0 0.0
    %564 = vmatpush1.msra.mxu0 0.0
    %565 = vmatprep.subr.mxu0 0.0
    %566 = vmatpush1.msra.mxu0 0.0
    %567 = vmatprep.subr.mxu0 0.0
    %568 = vmatpush1.msra.mxu0 0.0
    %569 = vmatprep.subr.mxu0 0.0
    %570 = vmatpush1.msra.mxu0 0.0
    %571 = vmatprep.subr.mxu0 0.0
    %572 = vmatpush1.msra.mxu0 0.0
    %573 = vmatprep.subr.mxu0 0.0
    %574 = vmatpush1.msra.mxu0 0.0
    %575 = vmatprep.subr.mxu0 0.0
    %576 = vmatpush1.msra.mxu0 0.0
    %577 = vmatprep.mubr.f32.mxu0 0.0
    %578 = vmatmul.mubr.f32.gmra.mrb[0].mxu0 %v477
    %v579 = vpop.f32.mrb[0].mxu0
    %v580 = vadd.f32 %v389, %v579
    %v581 = vpop.f32.mrb[0].mxu0
    %582 = vmatprep.mubr.f32.mxu0 0.0
    %583 = vmatmul.mubr.f32.gmra.mrb[0].mxu0 %v478
    %v584 = vpop.f32.mrb[0].mxu0
    %v585 = vadd.f32 %v394, %v584
    %v586 = vpop.f32.mrb[0].mxu0
    %587 = vmatprep.mubr.f32.mxu0 0.0
    %588 = vmatmul.mubr.f32.gmra.mrb[0].mxu0 %v479
    %v589 = vpop.f32.mrb[0].mxu0
    %v590 = vadd.f32 %v399, %v589
    %v591 = vpop.f32.mrb[0].mxu0
    %592 = vmatprep.mubr.f32.mxu0 0.0
    %593 = vmatmul.mubr.f32.gmra.mrb[0].mxu0 %v480
    %v594 = vpop.f32.mrb[0].mxu0
    %v595 = vadd.f32 %v404, %v594
    %v596 = vpop.f32.mrb[0].mxu0
    %597 = vmatprep.mubr.f32.mxu0 0.0
    %598 = vmatmul.mubr.f32.gmra.mrb[0].mxu0 %v481
    %v599 = vpop.f32.mrb[0].mxu0
    %v600 = vadd.f32 %v409, %v599
    %v601 = vpop.f32.mrb[0].mxu0
    %602 = vmatprep.mubr.f32.mxu0 0.0
    %603 = vmatmul.mubr.f32.gmra.mrb[0].mxu0 %v482
    %v604 = vpop.f32.mrb[0].mxu0
    %v605 = vadd.f32 %v414, %v604
    %v606 = vpop.f32.mrb[0].mxu0
    %607 = vmatprep.mubr.f32.mxu0 0.0
    %608 = vmatmul.mubr.f32.gmra.mrb[0].mxu0 %v483
    %v609 = vpop.f32.mrb[0].mxu0
    %v610 = vadd.f32 %v419, %v609
    %v611 = vpop.f32.mrb[0].mxu0
    %612 = vmatprep.mubr.f32.mxu0 0.0
    %613 = vmatmul.mubr.f32.gmra.mrb[0].mxu0 %v484
    %v614 = vpop.f32.mrb[0].mxu0
    %v615 = vadd.f32 %v424, %v614
    %v616 = vpop.f32.mrb[0].mxu0
    %617 = vmatprep.mubr.f32.mxu0 0.0
    %618 = vmatmul.mubr.f32.gmra.mrb[0].mxu0 %v485
    %v619 = vpop.f32.mrb[0].mxu0
    %v620 = vadd.f32 %v429, %v619
    %v621 = vpop.f32.mrb[0].mxu0
    %622 = vmatprep.mubr.f32.mxu0 0.0
    %623 = vmatmul.mubr.f32.gmra.mrb[0].mxu0 %v486
    %v624 = vpop.f32.mrb[0].mxu0
    %v625 = vadd.f32 %v434, %v624
    %v626 = vpop.f32.mrb[0].mxu0
    %627 = vmatprep.mubr.f32.mxu0 0.0
    %628 = vmatmul.mubr.f32.gmra.mrb[0].mxu0 %v487
    %v629 = vpop.f32.mrb[0].mxu0
    %v630 = vadd.f32 %v439, %v629
    %v631 = vpop.f32.mrb[0].mxu0
    %632 = vmatprep.mubr.f32.mxu0 0.0
    %633 = vmatmul.mubr.f32.gmra.mrb[0].mxu0 %v488
    %v634 = vpop.f32.mrb[0].mxu0
    %v635 = vadd.f32 %v444, %v634
    %v636 = vpop.f32.mrb[0].mxu0
    %637 = vmatprep.mubr.f32.mxu0 0.0
    %638 = vmatmul.mubr.f32.gmra.mrb[0].mxu0 %v489
    %v639 = vpop.f32.mrb[0].mxu0
    %v640 = vadd.f32 %v449, %v639
    %v641 = vpop.f32.mrb[0].mxu0
    %642 = vmatprep.mubr.f32.mxu0 0.0
    %643 = vmatmul.mubr.f32.gmra.mrb[0].mxu0 %v490
    %v644 = vpop.f32.mrb[0].mxu0
    %v645 = vadd.f32 %v454, %v644
    %v646 = vpop.f32.mrb[0].mxu0
    %647 = vmatprep.mubr.f32.mxu0 0.0
    %648 = vmatmul.mubr.f32.gmra.mrb[0].mxu0 %v491
    %v649 = vpop.f32.mrb[0].mxu0
    %v650 = vadd.f32 %v459, %v649
    %v651 = vpop.f32.mrb[0].mxu0
    %652 = vmatprep.mubr.f32.mxu0 0.0
    %653 = vmatmul.mubr.f32.gmra.mrb[0].mxu0 %v492
    %v654 = vpop.f32.mrb[0].mxu0
    %v655 = vadd.f32 %v464, %v654
    %v656 = vpop.f32.mrb[0].mxu0
    %657 = vmatprep.mubr.f32.mxu0 0.0
    %658 = vmatmul.mubr.f32.gmra.mrb[0].mxu0 %v493
    %v659 = vpop.f32.mrb[0].mxu0
    %v660 = vadd.f32 %v469, %v659
    %v661 = vpop.f32.mrb[0].mxu0
    %662 = vmatprep.mubr.f32.mxu0 0.0
    %663 = vmatmul.mubr.f32.gmra.mrb[0].mxu0 %v494
    %v664 = vpop.f32.mrb[0].mxu0
    %v665 = vadd.f32 %v474, %v664
    %v666 = vpop.f32.mrb[0].mxu0
    %667 = vdwg.mxu0
    %s668 = scalar_lea.vmem [#allocation2], 32
    %v669 = vld [vmem:[%s668] sm:$0xff]
    %v670 = vld [vmem:[%s668 + $0x8] sm:$0xf]
    %v671 = vld [vmem:[%s668 + $0x10] sm:$0xff]
    %v672 = vld [vmem:[%s668 + $0x18] sm:$0xf]
    %v673 = vld [vmem:[%s668 + $0x20] sm:$0xff]
    %v674 = vld [vmem:[%s668 + $0x28] sm:$0xf]
    %v675 = vld [vmem:[%s668 + $0x30] sm:$0xff]
    %v676 = vld [vmem:[%s668 + $0x38] sm:$0xf]
    %v677 = vld [vmem:[%s668 + $0x40] sm:$0xff]
    %v678 = vld [vmem:[%s668 + $0x48] sm:$0xf]
    %v679 = vld [vmem:[%s668 + $0x50] sm:$0xff]
    %v680 = vld [vmem:[%s668 + $0x58] sm:$0xf]
    %v681 = vld [vmem:[%s668 + $0x60] sm:$0xff]
    %v682 = vld [vmem:[%s668 + $0x68] sm:$0xf]
    %v683 = vld [vmem:[%s668 + $0x70] sm:$0xff]
    %v684 = vld [vmem:[%s668 + $0x78] sm:$0xf]
    %v685 = vld [vmem:[%s668 + $0x80] sm:$0xff]
    %v686 = vld [vmem:[%s668 + $0x88] sm:$0xf]
    %v687 = vld [vmem:[%s668 + $0x90] sm:$0xff]
    %v688 = vld [vmem:[%s668 + $0x98] sm:$0xf]
    %v689 = vld [vmem:[%s668 + $0xa0] sm:$0xff]
    %v690 = vld [vmem:[%s668 + $0xa8] sm:$0xf]
    %v691 = vld [vmem:[%s668 + $0xb0] sm:$0xff]
    %v692 = vld [vmem:[%s668 + $0xb8] sm:$0xf]
    %v717 = vcombine.high %v669, %v669
    %v718 = vcombine.high %v671, %v671
    %v719 = vcombine.high %v673, %v673
    %v720 = vcombine.high %v675, %v675
    %v721 = vcombine.high %v677, %v677
    %v722 = vcombine.high %v679, %v679
    %v723 = vcombine.high %v681, %v681
    %v724 = vcombine.high %v683, %v683
    %v725 = vcombine.high %v685, %v685
    %v726 = vcombine.high %v687, %v687
    %v727 = vcombine.high %v689, %v689
    %v728 = vcombine.high %v691, %v691
    %s729 = scalar_lea.vmem [#allocation6], 256
    %v730 = vld [vmem:[%s729] sm:$0xff]
    %v731 = vld [vmem:[%s729 + $0x8] sm:$0xff]
    %v732 = vld [vmem:[%s729 + $0x10] sm:$0xff]
    %v733 = vld [vmem:[%s729 + $0x18] sm:$0xff]
    %v734 = vld [vmem:[%s729 + $0x20] sm:$0xff]
    %v735 = vld [vmem:[%s729 + $0x28] sm:$0xff]
    %v736 = vld [vmem:[%s729 + $0x30] sm:$0xff]
    %v737 = vld [vmem:[%s729 + $0x38] sm:$0xff]
    %v738 = vld [vmem:[%s729 + $0x40] sm:$0xff]
    %v739 = vld [vmem:[%s729 + $0x48] sm:$0xff]
    %v740 = vld [vmem:[%s729 + $0x50] sm:$0xff]
    %v741 = vld [vmem:[%s729 + $0x58] sm:$0xff]
    %v742 = vld [vmem:[%s729 + $0x60] sm:$0xff]
    %v743 = vld [vmem:[%s729 + $0x68] sm:$0xff]
    %v744 = vld [vmem:[%s729 + $0x70] sm:$0xff]
    %v745 = vld [vmem:[%s729 + $0x78] sm:$0xff]
    %v746 = vcombine.low %v669, %v717
    %v747 = vcombine.low %v670, %v671
    %v748 = vcombine.low %v718, %v672
    %v749 = vcombine.low %v673, %v719
    %v750 = vcombine.low %v674, %v675
    %v751 = vcombine.low %v720, %v676
    %v752 = vcombine.low %v677, %v721
    %v753 = vcombine.low %v678, %v679
    %v754 = vcombine.low %v722, %v680
    %v755 = vcombine.low %v681, %v723
    %v756 = vcombine.low %v682, %v683
    %v757 = vcombine.low %v724, %v684
    %v758 = vcombine.low %v685, %v725
    %v759 = vcombine.low %v686, %v687
    %v760 = vcombine.low %v726, %v688
    %v761 = vcombine.low %v689, %v727
    %v762 = vcombine.low %v690, %v691
    %v763 = vcombine.low %v728, %v692
    %782 = vmatprep.subr.mxu0 0.0
    %783 = vmatpush1.msra.mxu0 %v730
    %784 = vmatprep.subr.mxu0 0.0
    %785 = vmatpush1.msra.mxu0 %v731
    %786 = vmatprep.subr.mxu0 0.0
    %787 = vmatpush1.msra.mxu0 %v732
    %788 = vmatprep.subr.mxu0 0.0
    %789 = vmatpush1.msra.mxu0 %v733
    %790 = vmatprep.subr.mxu0 0.0
    %791 = vmatpush1.msra.mxu0 %v734
    %792 = vmatprep.subr.mxu0 0.0
    %793 = vmatpush1.msra.mxu0 %v735
    %794 = vmatprep.subr.mxu0 0.0
    %795 = vmatpush1.msra.mxu0 %v736
    %796 = vmatprep.subr.mxu0 0.0
    %797 = vmatpush1.msra.mxu0 %v737
    %798 = vmatprep.subr.mxu0 0.0
    %799 = vmatpush1.msra.mxu0 %v738
    %800 = vmatprep.subr.mxu0 0.0
    %801 = vmatpush1.msra.mxu0 %v739
    %802 = vmatprep.subr.mxu0 0.0
    %803 = vmatpush1.msra.mxu0 %v740
    %804 = vmatprep.subr.mxu0 0.0
    %805 = vmatpush1.msra.mxu0 %v741
    %806 = vmatprep.subr.mxu0 0.0
    %807 = vmatpush1.msra.mxu0 %v742
    %808 = vmatprep.subr.mxu0 0.0
    %809 = vmatpush1.msra.mxu0 %v743
    %810 = vmatprep.subr.mxu0 0.0
    %811 = vmatpush1.msra.mxu0 %v744
    %812 = vmatprep.subr.mxu0 0.0
    %813 = vmatpush1.msra.mxu0 %v745
    %814 = vmatprep.subr.mxu0 0.0
    %815 = vmatpush1.msra.mxu0 0.0
    %816 = vmatprep.subr.mxu0 0.0
    %817 = vmatpush1.msra.mxu0 0.0
    %818 = vmatprep.subr.mxu0 0.0
    %819 = vmatpush1.msra.mxu0 0.0
    %820 = vmatprep.subr.mxu0 0.0
    %821 = vmatpush1.msra.mxu0 0.0
    %822 = vmatprep.subr.mxu0 0.0
    %823 = vmatpush1.msra.mxu0 0.0
    %824 = vmatprep.subr.mxu0 0.0
    %825 = vmatpush1.msra.mxu0 0.0
    %826 = vmatprep.subr.mxu0 0.0
    %827 = vmatpush1.msra.mxu0 0.0
    %828 = vmatprep.subr.mxu0 0.0
    %829 = vmatpush1.msra.mxu0 0.0
    %830 = vmatprep.subr.mxu0 0.0
    %831 = vmatpush1.msra.mxu0 0.0
    %832 = vmatprep.subr.mxu0 0.0
    %833 = vmatpush1.msra.mxu0 0.0
    %834 = vmatprep.subr.mxu0 0.0
    %835 = vmatpush1.msra.mxu0 0.0
    %836 = vmatprep.subr.mxu0 0.0
    %837 = vmatpush1.msra.mxu0 0.0
    %838 = vmatprep.subr.mxu0 0.0
    %839 = vmatpush1.msra.mxu0 0.0
    %840 = vmatprep.subr.mxu0 0.0
    %841 = vmatpush1.msra.mxu0 0.0
    %842 = vmatprep.subr.mxu0 0.0
    %843 = vmatpush1.msra.mxu0 0.0
    %844 = vmatprep.subr.mxu0 0.0
    %845 = vmatpush1.msra.mxu0 0.0
    %846 = vmatprep.mubr.f32.mxu0 0.0
    %847 = vmatmul.mubr.f32.gmra.mrb[0].mxu0 %v746
    %v848 = vpop.f32.mrb[0].mxu0
    %v849 = vadd.f32 0.0, %v848
    %v850 = vpop.f32.mrb[0].mxu0
    %851 = vmatprep.mubr.f32.mxu0 0.0
    %852 = vmatmul.mubr.f32.gmra.mrb[0].mxu0 %v747
    %v853 = vpop.f32.mrb[0].mxu0
    %v854 = vadd.f32 0.0, %v853
    %v855 = vpop.f32.mrb[0].mxu0
    %856 = vmatprep.mubr.f32.mxu0 0.0
    %857 = vmatmul.mubr.f32.gmra.mrb[0].mxu0 %v748
    %v858 = vpop.f32.mrb[0].mxu0
    %v859 = vadd.f32 0.0, %v858
    %v860 = vpop.f32.mrb[0].mxu0
    %861 = vmatprep.mubr.f32.mxu0 0.0
    %862 = vmatmul.mubr.f32.gmra.mrb[0].mxu0 %v749
    %v863 = vpop.f32.mrb[0].mxu0
    %v864 = vadd.f32 0.0, %v863
    %v865 = vpop.f32.mrb[0].mxu0
    %866 = vmatprep.mubr.f32.mxu0 0.0
    %867 = vmatmul.mubr.f32.gmra.mrb[0].mxu0 %v750
    %v868 = vpop.f32.mrb[0].mxu0
    %v869 = vadd.f32 0.0, %v868
    %v870 = vpop.f32.mrb[0].mxu0
    %871 = vmatprep.mubr.f32.mxu0 0.0
    %872 = vmatmul.mubr.f32.gmra.mrb[0].mxu0 %v751
    %v873 = vpop.f32.mrb[0].mxu0
    %v874 = vadd.f32 0.0, %v873
    %v875 = vpop.f32.mrb[0].mxu0
    %876 = vmatprep.mubr.f32.mxu0 0.0
    %877 = vmatmul.mubr.f32.gmra.mrb[0].mxu0 %v752
    %v878 = vpop.f32.mrb[0].mxu0
    %v879 = vadd.f32 0.0, %v878
    %v880 = vpop.f32.mrb[0].mxu0
    %881 = vmatprep.mubr.f32.mxu0 0.0
    %882 = vmatmul.mubr.f32.gmra.mrb[0].mxu0 %v753
    %v883 = vpop.f32.mrb[0].mxu0
    %v884 = vadd.f32 0.0, %v883
    %v885 = vpop.f32.mrb[0].mxu0
    %886 = vmatprep.mubr.f32.mxu0 0.0
    %887 = vmatmul.mubr.f32.gmra.mrb[0].mxu0 %v754
    %v888 = vpop.f32.mrb[0].mxu0
    %v889 = vadd.f32 0.0, %v888
    %v890 = vpop.f32.mrb[0].mxu0
    %891 = vmatprep.mubr.f32.mxu0 0.0
    %892 = vmatmul.mubr.f32.gmra.mrb[0].mxu0 %v755
    %v893 = vpop.f32.mrb[0].mxu0
    %v894 = vadd.f32 0.0, %v893
    %v895 = vpop.f32.mrb[0].mxu0
    %896 = vmatprep.mubr.f32.mxu0 0.0
    %897 = vmatmul.mubr.f32.gmra.mrb[0].mxu0 %v756
    %v898 = vpop.f32.mrb[0].mxu0
    %v899 = vadd.f32 0.0, %v898
    %v900 = vpop.f32.mrb[0].mxu0
    %901 = vmatprep.mubr.f32.mxu0 0.0
    %902 = vmatmul.mubr.f32.gmra.mrb[0].mxu0 %v757
    %v903 = vpop.f32.mrb[0].mxu0
    %v904 = vadd.f32 0.0, %v903
    %v905 = vpop.f32.mrb[0].mxu0
    %906 = vmatprep.mubr.f32.mxu0 0.0
    %907 = vmatmul.mubr.f32.gmra.mrb[0].mxu0 %v758
    %v908 = vpop.f32.mrb[0].mxu0
    %v909 = vadd.f32 0.0, %v908
    %v910 = vpop.f32.mrb[0].mxu0
    %911 = vmatprep.mubr.f32.mxu0 0.0
    %912 = vmatmul.mubr.f32.gmra.mrb[0].mxu0 %v759
    %v913 = vpop.f32.mrb[0].mxu0
    %v914 = vadd.f32 0.0, %v913
    %v915 = vpop.f32.mrb[0].mxu0
    %916 = vmatprep.mubr.f32.mxu0 0.0
    %917 = vmatmul.mubr.f32.gmra.mrb[0].mxu0 %v760
    %v918 = vpop.f32.mrb[0].mxu0
    %v919 = vadd.f32 0.0, %v918
    %v920 = vpop.f32.mrb[0].mxu0
    %921 = vmatprep.mubr.f32.mxu0 0.0
    %922 = vmatmul.mubr.f32.gmra.mrb[0].mxu0 %v761
    %v923 = vpop.f32.mrb[0].mxu0
    %v924 = vadd.f32 0.0, %v923
    %v925 = vpop.f32.mrb[0].mxu0
    %926 = vmatprep.mubr.f32.mxu0 0.0
    %927 = vmatmul.mubr.f32.gmra.mrb[0].mxu0 %v762
    %v928 = vpop.f32.mrb[0].mxu0
    %v929 = vadd.f32 0.0, %v928
    %v930 = vpop.f32.mrb[0].mxu0
    %931 = vmatprep.mubr.f32.mxu0 0.0
    %932 = vmatmul.mubr.f32.gmra.mrb[0].mxu0 %v763
    %v933 = vpop.f32.mrb[0].mxu0
    %v934 = vadd.f32 0.0, %v933
    %v935 = vpop.f32.mrb[0].mxu0
    %936 = vdwg.mxu0
    %v937 = vadd.f32 %v580, %v849
    %v938 = vadd.f32 %v585, %v854
    %v939 = vadd.f32 %v590, %v859
    %v940 = vadd.f32 %v595, %v864
    %v941 = vadd.f32 %v600, %v869
    %v942 = vadd.f32 %v605, %v874
    %v943 = vadd.f32 %v610, %v879
    %v944 = vadd.f32 %v615, %v884
    %v945 = vadd.f32 %v620, %v889
    %v946 = vadd.f32 %v625, %v894
    %v947 = vadd.f32 %v630, %v899
    %v948 = vadd.f32 %v635, %v904
    %v949 = vadd.f32 %v640, %v909
    %v950 = vadd.f32 %v645, %v914
    %v951 = vadd.f32 %v650, %v919
    %v952 = vadd.f32 %v655, %v924
    %v953 = vadd.f32 %v660, %v929
    %v954 = vadd.f32 %v665, %v934
    %v955 = vld [vmem:[%s107] sm:$0xff]
    %v956 = vld [vmem:[%s107 + $0x8] sm:$0xf]
    %v957 = vld [vmem:[%s107 + $0x10] sm:$0xff]
    %v958 = vld [vmem:[%s107 + $0x18] sm:$0xf]
    %v959 = vld [vmem:[%s107 + $0x20] sm:$0xff]
    %v960 = vld [vmem:[%s107 + $0x28] sm:$0xf]
    %v961 = vld [vmem:[%s107 + $0x30] sm:$0xff]
    %v962 = vld [vmem:[%s107 + $0x38] sm:$0xf]
    %v963 = vld [vmem:[%s107 + $0x40] sm:$0xff]
    %v964 = vld [vmem:[%s107 + $0x48] sm:$0xf]
    %v965 = vld [vmem:[%s107 + $0x50] sm:$0xff]
    %v966 = vld [vmem:[%s107 + $0x58] sm:$0xf]
    %v967 = vld [vmem:[%s107 + $0x60] sm:$0xff]
    %v968 = vld [vmem:[%s107 + $0x68] sm:$0xf]
    %v969 = vld [vmem:[%s107 + $0x70] sm:$0xff]
    %v970 = vld [vmem:[%s107 + $0x78] sm:$0xf]
    %v971 = vld [vmem:[%s107 + $0x80] sm:$0xff]
    %v972 = vld [vmem:[%s107 + $0x88] sm:$0xf]
    %v973 = vld [vmem:[%s107 + $0x90] sm:$0xff]
    %v974 = vld [vmem:[%s107 + $0x98] sm:$0xf]
    %v975 = vld [vmem:[%s107 + $0xa0] sm:$0xff]
    %v976 = vld [vmem:[%s107 + $0xa8] sm:$0xf]
    %v977 = vld [vmem:[%s107 + $0xb0] sm:$0xff]
    %v978 = vld [vmem:[%s107 + $0xb8] sm:$0xf]
    %v1003 = vcombine.high %v955, %v955
    %v1004 = vcombine.high %v957, %v957
    %v1005 = vcombine.high %v959, %v959
    %v1006 = vcombine.high %v961, %v961
    %v1007 = vcombine.high %v963, %v963
    %v1008 = vcombine.high %v965, %v965
    %v1009 = vcombine.high %v967, %v967
    %v1010 = vcombine.high %v969, %v969
    %v1011 = vcombine.high %v971, %v971
    %v1012 = vcombine.high %v973, %v973
    %v1013 = vcombine.high %v975, %v975
    %v1014 = vcombine.high %v977, %v977
    %s1015 = scalar_lea.vmem [#allocation6], 384
    %v1016 = vld [vmem:[%s1015] sm:$0xff]
    %v1017 = vld [vmem:[%s1015 + $0x8] sm:$0xff]
    %v1018 = vld [vmem:[%s1015 + $0x10] sm:$0xff]
    %v1019 = vld [vmem:[%s1015 + $0x18] sm:$0xff]
    %v1020 = vld [vmem:[%s1015 + $0x20] sm:$0xff]
    %v1021 = vld [vmem:[%s1015 + $0x28] sm:$0xff]
    %v1022 = vld [vmem:[%s1015 + $0x30] sm:$0xff]
    %v1023 = vld [vmem:[%s1015 + $0x38] sm:$0xff]
    %v1024 = vld [vmem:[%s1015 + $0x40] sm:$0xff]
    %v1025 = vld [vmem:[%s1015 + $0x48] sm:$0xff]
    %v1026 = vld [vmem:[%s1015 + $0x50] sm:$0xff]
    %v1027 = vld [vmem:[%s1015 + $0x58] sm:$0xff]
    %v1028 = vld [vmem:[%s1015 + $0x60] sm:$0xff]
    %v1029 = vld [vmem:[%s1015 + $0x68] sm:$0xff]
    %v1030 = vld [vmem:[%s1015 + $0x70] sm:$0xff]
    %v1031 = vld [vmem:[%s1015 + $0x78] sm:$0xff]
    %v1032 = vcombine.low %v955, %v1003
    %v1033 = vcombine.low %v956, %v957
    %v1034 = vcombine.low %v1004, %v958
    %v1035 = vcombine.low %v959, %v1005
    %v1036 = vcombine.low %v960, %v961
    %v1037 = vcombine.low %v1006, %v962
    %v1038 = vcombine.low %v963, %v1007
    %v1039 = vcombine.low %v964, %v965
    %v1040 = vcombine.low %v1008, %v966
    %v1041 = vcombine.low %v967, %v1009
    %v1042 = vcombine.low %v968, %v969
    %v1043 = vcombine.low %v1010, %v970
    %v1044 = vcombine.low %v971, %v1011
    %v1045 = vcombine.low %v972, %v973
    %v1046 = vcombine.low %v1012, %v974
    %v1047 = vcombine.low %v975, %v1013
    %v1048 = vcombine.low %v976, %v977
    %v1049 = vcombine.low %v1014, %v978
    %1068 = vmatprep.subr.mxu0 0.0
    %1069 = vmatpush1.msra.mxu0 %v1016
    %1070 = vmatprep.subr.mxu0 0.0
    %1071 = vmatpush1.msra.mxu0 %v1017
    %1072 = vmatprep.subr.mxu0 0.0
    %1073 = vmatpush1.msra.mxu0 %v1018
    %1074 = vmatprep.subr.mxu0 0.0
    %1075 = vmatpush1.msra.mxu0 %v1019
    %1076 = vmatprep.subr.mxu0 0.0
    %1077 = vmatpush1.msra.mxu0 %v1020
    %1078 = vmatprep.subr.mxu0 0.0
    %1079 = vmatpush1.msra.mxu0 %v1021
    %1080 = vmatprep.subr.mxu0 0.0
    %1081 = vmatpush1.msra.mxu0 %v1022
    %1082 = vmatprep.subr.mxu0 0.0
    %1083 = vmatpush1.msra.mxu0 %v1023
    %1084 = vmatprep.subr.mxu0 0.0
    %1085 = vmatpush1.msra.mxu0 %v1024
    %1086 = vmatprep.subr.mxu0 0.0
    %1087 = vmatpush1.msra.mxu0 %v1025
    %1088 = vmatprep.subr.mxu0 0.0
    %1089 = vmatpush1.msra.mxu0 %v1026
    %1090 = vmatprep.subr.mxu0 0.0
    %1091 = vmatpush1.msra.mxu0 %v1027
    %1092 = vmatprep.subr.mxu0 0.0
    %1093 = vmatpush1.msra.mxu0 %v1028
    %1094 = vmatprep.subr.mxu0 0.0
    %1095 = vmatpush1.msra.mxu0 %v1029
    %1096 = vmatprep.subr.mxu0 0.0
    %1097 = vmatpush1.msra.mxu0 %v1030
    %1098 = vmatprep.subr.mxu0 0.0
    %1099 = vmatpush1.msra.mxu0 %v1031
    %1100 = vmatprep.subr.mxu0 0.0
    %1101 = vmatpush1.msra.mxu0 0.0
    %1102 = vmatprep.subr.mxu0 0.0
    %1103 = vmatpush1.msra.mxu0 0.0
    %1104 = vmatprep.subr.mxu0 0.0
    %1105 = vmatpush1.msra.mxu0 0.0
    %1106 = vmatprep.subr.mxu0 0.0
    %1107 = vmatpush1.msra.mxu0 0.0
    %1108 = vmatprep.subr.mxu0 0.0
    %1109 = vmatpush1.msra.mxu0 0.0
    %1110 = vmatprep.subr.mxu0 0.0
    %1111 = vmatpush1.msra.mxu0 0.0
    %1112 = vmatprep.subr.mxu0 0.0
    %1113 = vmatpush1.msra.mxu0 0.0
    %1114 = vmatprep.subr.mxu0 0.0
    %1115 = vmatpush1.msra.mxu0 0.0
    %1116 = vmatprep.subr.mxu0 0.0
    %1117 = vmatpush1.msra.mxu0 0.0
    %1118 = vmatprep.subr.mxu0 0.0
    %1119 = vmatpush1.msra.mxu0 0.0
    %1120 = vmatprep.subr.mxu0 0.0
    %1121 = vmatpush1.msra.mxu0 0.0
    %1122 = vmatprep.subr.mxu0 0.0
    %1123 = vmatpush1.msra.mxu0 0.0
    %1124 = vmatprep.subr.mxu0 0.0
    %1125 = vmatpush1.msra.mxu0 0.0
    %1126 = vmatprep.subr.mxu0 0.0
    %1127 = vmatpush1.msra.mxu0 0.0
    %1128 = vmatprep.subr.mxu0 0.0
    %1129 = vmatpush1.msra.mxu0 0.0
    %1130 = vmatprep.subr.mxu0 0.0
    %1131 = vmatpush1.msra.mxu0 0.0
    %1132 = vmatprep.mubr.f32.mxu0 0.0
    %1133 = vmatmul.mubr.f32.gmra.mrb[0].mxu0 %v1032
    %v1134 = vpop.f32.mrb[0].mxu0
    %v1135 = vadd.f32 0.0, %v1134
    %v1136 = vpop.f32.mrb[0].mxu0
    %1137 = vmatprep.mubr.f32.mxu0 0.0
    %1138 = vmatmul.mubr.f32.gmra.mrb[0].mxu0 %v1033
    %v1139 = vpop.f32.mrb[0].mxu0
    %v1140 = vadd.f32 0.0, %v1139
    %v1141 = vpop.f32.mrb[0].mxu0
    %1142 = vmatprep.mubr.f32.mxu0 0.0
    %1143 = vmatmul.mubr.f32.gmra.mrb[0].mxu0 %v1034
    %v1144 = vpop.f32.mrb[0].mxu0
    %v1145 = vadd.f32 0.0, %v1144
    %v1146 = vpop.f32.mrb[0].mxu0
    %1147 = vmatprep.mubr.f32.mxu0 0.0
    %1148 = vmatmul.mubr.f32.gmra.mrb[0].mxu0 %v1035
    %v1149 = vpop.f32.mrb[0].mxu0
    %v1150 = vadd.f32 0.0, %v1149
    %v1151 = vpop.f32.mrb[0].mxu0
    %1152 = vmatprep.mubr.f32.mxu0 0.0
    %1153 = vmatmul.mubr.f32.gmra.mrb[0].mxu0 %v1036
    %v1154 = vpop.f32.mrb[0].mxu0
    %v1155 = vadd.f32 0.0, %v1154
    %v1156 = vpop.f32.mrb[0].mxu0
    %1157 = vmatprep.mubr.f32.mxu0 0.0
    %1158 = vmatmul.mubr.f32.gmra.mrb[0].mxu0 %v1037
    %v1159 = vpop.f32.mrb[0].mxu0
    %v1160 = vadd.f32 0.0, %v1159
    %v1161 = vpop.f32.mrb[0].mxu0
    %1162 = vmatprep.mubr.f32.mxu0 0.0
    %1163 = vmatmul.mubr.f32.gmra.mrb[0].mxu0 %v1038
    %v1164 = vpop.f32.mrb[0].mxu0
    %v1165 = vadd.f32 0.0, %v1164
    %v1166 = vpop.f32.mrb[0].mxu0
    %1167 = vmatprep.mubr.f32.mxu0 0.0
    %1168 = vmatmul.mubr.f32.gmra.mrb[0].mxu0 %v1039
    %v1169 = vpop.f32.mrb[0].mxu0
    %v1170 = vadd.f32 0.0, %v1169
    %v1171 = vpop.f32.mrb[0].mxu0
    %1172 = vmatprep.mubr.f32.mxu0 0.0
    %1173 = vmatmul.mubr.f32.gmra.mrb[0].mxu0 %v1040
    %v1174 = vpop.f32.mrb[0].mxu0
    %v1175 = vadd.f32 0.0, %v1174
    %v1176 = vpop.f32.mrb[0].mxu0
    %1177 = vmatprep.mubr.f32.mxu0 0.0
    %1178 = vmatmul.mubr.f32.gmra.mrb[0].mxu0 %v1041
    %v1179 = vpop.f32.mrb[0].mxu0
    %v1180 = vadd.f32 0.0, %v1179
    %v1181 = vpop.f32.mrb[0].mxu0
    %1182 = vmatprep.mubr.f32.mxu0 0.0
    %1183 = vmatmul.mubr.f32.gmra.mrb[0].mxu0 %v1042
    %v1184 = vpop.f32.mrb[0].mxu0
    %v1185 = vadd.f32 0.0, %v1184
    %v1186 = vpop.f32.mrb[0].mxu0
    %1187 = vmatprep.mubr.f32.mxu0 0.0
    %1188 = vmatmul.mubr.f32.gmra.mrb[0].mxu0 %v1043
    %v1189 = vpop.f32.mrb[0].mxu0
    %v1190 = vadd.f32 0.0, %v1189
    %v1191 = vpop.f32.mrb[0].mxu0
    %1192 = vmatprep.mubr.f32.mxu0 0.0
    %1193 = vmatmul.mubr.f32.gmra.mrb[0].mxu0 %v1044
    %v1194 = vpop.f32.mrb[0].mxu0
    %v1195 = vadd.f32 0.0, %v1194
    %v1196 = vpop.f32.mrb[0].mxu0
    %1197 = vmatprep.mubr.f32.mxu0 0.0
    %1198 = vmatmul.mubr.f32.gmra.mrb[0].mxu0 %v1045
    %v1199 = vpop.f32.mrb[0].mxu0
    %v1200 = vadd.f32 0.0, %v1199
    %v1201 = vpop.f32.mrb[0].mxu0
    %1202 = vmatprep.mubr.f32.mxu0 0.0
    %1203 = vmatmul.mubr.f32.gmra.mrb[0].mxu0 %v1046
    %v1204 = vpop.f32.mrb[0].mxu0
    %v1205 = vadd.f32 0.0, %v1204
    %v1206 = vpop.f32.mrb[0].mxu0
    %1207 = vmatprep.mubr.f32.mxu0 0.0
    %1208 = vmatmul.mubr.f32.gmra.mrb[0].mxu0 %v1047
    %v1209 = vpop.f32.mrb[0].mxu0
    %v1210 = vadd.f32 0.0, %v1209
    %v1211 = vpop.f32.mrb[0].mxu0
    %1212 = vmatprep.mubr.f32.mxu0 0.0
    %1213 = vmatmul.mubr.f32.gmra.mrb[0].mxu0 %v1048
    %v1214 = vpop.f32.mrb[0].mxu0
    %v1215 = vadd.f32 0.0, %v1214
    %v1216 = vpop.f32.mrb[0].mxu0
    %1217 = vmatprep.mubr.f32.mxu0 0.0
    %1218 = vmatmul.mubr.f32.gmra.mrb[0].mxu0 %v1049
    %v1219 = vpop.f32.mrb[0].mxu0
    %v1220 = vadd.f32 0.0, %v1219
    %v1221 = vpop.f32.mrb[0].mxu0
    %1222 = vdwg.mxu0
    %v1223 = vadd.f32 %v937, %v1135
    %v1224 = vadd.f32 %v938, %v1140
    %v1225 = vadd.f32 %v939, %v1145
    %v1226 = vadd.f32 %v940, %v1150
    %v1227 = vadd.f32 %v941, %v1155
    %v1228 = vadd.f32 %v942, %v1160
    %v1229 = vadd.f32 %v943, %v1165
    %v1230 = vadd.f32 %v944, %v1170
    %v1231 = vadd.f32 %v945, %v1175
    %v1232 = vadd.f32 %v946, %v1180
    %v1233 = vadd.f32 %v947, %v1185
    %v1234 = vadd.f32 %v948, %v1190
    %v1235 = vadd.f32 %v949, %v1195
    %v1236 = vadd.f32 %v950, %v1200
    %v1237 = vadd.f32 %v951, %v1205
    %v1238 = vadd.f32 %v952, %v1210
    %v1239 = vadd.f32 %v953, %v1215
    %v1240 = vadd.f32 %v954, %v1220
    %s1241 = scalar_lea.vmem [#allocation2], 64
    %v1242 = vld [vmem:[%s1241] sm:$0xff]
    %v1243 = vld [vmem:[%s1241 + $0x8] sm:$0xf]
    %v1244 = vld [vmem:[%s1241 + $0x10] sm:$0xff]
    %v1245 = vld [vmem:[%s1241 + $0x18] sm:$0xf]
    %v1246 = vld [vmem:[%s1241 + $0x20] sm:$0xff]
    %v1247 = vld [vmem:[%s1241 + $0x28] sm:$0xf]
    %v1248 = vld [vmem:[%s1241 + $0x30] sm:$0xff]
    %v1249 = vld [vmem:[%s1241 + $0x38] sm:$0xf]
    %v1250 = vld [vmem:[%s1241 + $0x40] sm:$0xff]
    %v1251 = vld [vmem:[%s1241 + $0x48] sm:$0xf]
    %v1252 = vld [vmem:[%s1241 + $0x50] sm:$0xff]
    %v1253 = vld [vmem:[%s1241 + $0x58] sm:$0xf]
    %v1254 = vld [vmem:[%s1241 + $0x60] sm:$0xff]
    %v1255 = vld [vmem:[%s1241 + $0x68] sm:$0xf]
    %v1256 = vld [vmem:[%s1241 + $0x70] sm:$0xff]
    %v1257 = vld [vmem:[%s1241 + $0x78] sm:$0xf]
    %v1258 = vld [vmem:[%s1241 + $0x80] sm:$0xff]
    %v1259 = vld [vmem:[%s1241 + $0x88] sm:$0xf]
    %v1260 = vld [vmem:[%s1241 + $0x90] sm:$0xff]
    %v1261 = vld [vmem:[%s1241 + $0x98] sm:$0xf]
    %v1262 = vld [vmem:[%s1241 + $0xa0] sm:$0xff]
    %v1263 = vld [vmem:[%s1241 + $0xa8] sm:$0xf]
    %v1264 = vld [vmem:[%s1241 + $0xb0] sm:$0xff]
    %v1265 = vld [vmem:[%s1241 + $0xb8] sm:$0xf]
    %v1290 = vcombine.high %v1242, %v1242
    %v1291 = vcombine.high %v1244, %v1244
    %v1292 = vcombine.high %v1246, %v1246
    %v1293 = vcombine.high %v1248, %v1248
    %v1294 = vcombine.high %v1250, %v1250
    %v1295 = vcombine.high %v1252, %v1252
    %v1296 = vcombine.high %v1254, %v1254
    %v1297 = vcombine.high %v1256, %v1256
    %v1298 = vcombine.high %v1258, %v1258
    %v1299 = vcombine.high %v1260, %v1260
    %v1300 = vcombine.high %v1262, %v1262
    %v1301 = vcombine.high %v1264, %v1264
    %s1302 = scalar_lea.vmem [#allocation6], 512
    %v1303 = vld [vmem:[%s1302] sm:$0xff]
    %v1304 = vld [vmem:[%s1302 + $0x8] sm:$0xff]
    %v1305 = vld [vmem:[%s1302 + $0x10] sm:$0xff]
    %v1306 = vld [vmem:[%s1302 + $0x18] sm:$0xff]
    %v1307 = vld [vmem:[%s1302 + $0x20] sm:$0xff]
    %v1308 = vld [vmem:[%s1302 + $0x28] sm:$0xff]
    %v1309 = vld [vmem:[%s1302 + $0x30] sm:$0xff]
    %v1310 = vld [vmem:[%s1302 + $0x38] sm:$0xff]
    %v1311 = vld [vmem:[%s1302 + $0x40] sm:$0xff]
    %v1312 = vld [vmem:[%s1302 + $0x48] sm:$0xff]
    %v1313 = vld [vmem:[%s1302 + $0x50] sm:$0xff]
    %v1314 = vld [vmem:[%s1302 + $0x58] sm:$0xff]
    %v1315 = vld [vmem:[%s1302 + $0x60] sm:$0xff]
    %v1316 = vld [vmem:[%s1302 + $0x68] sm:$0xff]
    %v1317 = vld [vmem:[%s1302 + $0x70] sm:$0xff]
    %v1318 = vld [vmem:[%s1302 + $0x78] sm:$0xff]
    %v1319 = vcombine.low %v1242, %v1290
    %v1320 = vcombine.low %v1243, %v1244
    %v1321 = vcombine.low %v1291, %v1245
    %v1322 = vcombine.low %v1246, %v1292
    %v1323 = vcombine.low %v1247, %v1248
    %v1324 = vcombine.low %v1293, %v1249
    %v1325 = vcombine.low %v1250, %v1294
    %v1326 = vcombine.low %v1251, %v1252
    %v1327 = vcombine.low %v1295, %v1253
    %v1328 = vcombine.low %v1254, %v1296
    %v1329 = vcombine.low %v1255, %v1256
    %v1330 = vcombine.low %v1297, %v1257
    %v1331 = vcombine.low %v1258, %v1298
    %v1332 = vcombine.low %v1259, %v1260
    %v1333 = vcombine.low %v1299, %v1261
    %v1334 = vcombine.low %v1262, %v1300
    %v1335 = vcombine.low %v1263, %v1264
    %v1336 = vcombine.low %v1301, %v1265
    %1355 = vmatprep.subr.mxu0 0.0
    %1356 = vmatpush1.msra.mxu0 %v1303
    %1357 = vmatprep.subr.mxu0 0.0
    %1358 = vmatpush1.msra.mxu0 %v1304
    %1359 = vmatprep.subr.mxu0 0.0
    %1360 = vmatpush1.msra.mxu0 %v1305
    %1361 = vmatprep.subr.mxu0 0.0
    %1362 = vmatpush1.msra.mxu0 %v1306
    %1363 = vmatprep.subr.mxu0 0.0
    %1364 = vmatpush1.msra.mxu0 %v1307
    %1365 = vmatprep.subr.mxu0 0.0
    %1366 = vmatpush1.msra.mxu0 %v1308
    %1367 = vmatprep.subr.mxu0 0.0
    %1368 = vmatpush1.msra.mxu0 %v1309
    %1369 = vmatprep.subr.mxu0 0.0
    %1370 = vmatpush1.msra.mxu0 %v1310
    %1371 = vmatprep.subr.mxu0 0.0
    %1372 = vmatpush1.msra.mxu0 %v1311
    %1373 = vmatprep.subr.mxu0 0.0
    %1374 = vmatpush1.msra.mxu0 %v1312
    %1375 = vmatprep.subr.mxu0 0.0
    %1376 = vmatpush1.msra.mxu0 %v1313
    %1377 = vmatprep.subr.mxu0 0.0
    %1378 = vmatpush1.msra.mxu0 %v1314
    %1379 = vmatprep.subr.mxu0 0.0
    %1380 = vmatpush1.msra.mxu0 %v1315
    %1381 = vmatprep.subr.mxu0 0.0
    %1382 = vmatpush1.msra.mxu0 %v1316
    %1383 = vmatprep.subr.mxu0 0.0
    %1384 = vmatpush1.msra.mxu0 %v1317
    %1385 = vmatprep.subr.mxu0 0.0
    %1386 = vmatpush1.msra.mxu0 %v1318
    %1387 = vmatprep.subr.mxu0 0.0
    %1388 = vmatpush1.msra.mxu0 0.0
    %1389 = vmatprep.subr.mxu0 0.0
    %1390 = vmatpush1.msra.mxu0 0.0
    %1391 = vmatprep.subr.mxu0 0.0
    %1392 = vmatpush1.msra.mxu0 0.0
    %1393 = vmatprep.subr.mxu0 0.0
    %1394 = vmatpush1.msra.mxu0 0.0
    %1395 = vmatprep.subr.mxu0 0.0
    %1396 = vmatpush1.msra.mxu0 0.0
    %1397 = vmatprep.subr.mxu0 0.0
    %1398 = vmatpush1.msra.mxu0 0.0
    %1399 = vmatprep.subr.mxu0 0.0
    %1400 = vmatpush1.msra.mxu0 0.0
    %1401 = vmatprep.subr.mxu0 0.0
    %1402 = vmatpush1.msra.mxu0 0.0
    %1403 = vmatprep.subr.mxu0 0.0
    %1404 = vmatpush1.msra.mxu0 0.0
    %1405 = vmatprep.subr.mxu0 0.0
    %1406 = vmatpush1.msra.mxu0 0.0
    %1407 = vmatprep.subr.mxu0 0.0
    %1408 = vmatpush1.msra.mxu0 0.0
    %1409 = vmatprep.subr.mxu0 0.0
    %1410 = vmatpush1.msra.mxu0 0.0
    %1411 = vmatprep.subr.mxu0 0.0
    %1412 = vmatpush1.msra.mxu0 0.0
    %1413 = vmatprep.subr.mxu0 0.0
    %1414 = vmatpush1.msra.mxu0 0.0
    %1415 = vmatprep.subr.mxu0 0.0
    %1416 = vmatpush1.msra.mxu0 0.0
    %1417 = vmatprep.subr.mxu0 0.0
    %1418 = vmatpush1.msra.mxu0 0.0
    %1419 = vmatprep.mubr.f32.mxu0 0.0
    %1420 = vmatmul.mubr.f32.gmra.mrb[0].mxu0 %v1319
    %v1421 = vpop.f32.mrb[0].mxu0
    %v1422 = vadd.f32 0.0, %v1421
    %v1423 = vpop.f32.mrb[0].mxu0
    %1424 = vmatprep.mubr.f32.mxu0 0.0
    %1425 = vmatmul.mubr.f32.gmra.mrb[0].mxu0 %v1320
    %v1426 = vpop.f32.mrb[0].mxu0
    %v1427 = vadd.f32 0.0, %v1426
    %v1428 = vpop.f32.mrb[0].mxu0
    %1429 = vmatprep.mubr.f32.mxu0 0.0
    %1430 = vmatmul.mubr.f32.gmra.mrb[0].mxu0 %v1321
    %v1431 = vpop.f32.mrb[0].mxu0
    %v1432 = vadd.f32 0.0, %v1431
    %v1433 = vpop.f32.mrb[0].mxu0
    %1434 = vmatprep.mubr.f32.mxu0 0.0
    %1435 = vmatmul.mubr.f32.gmra.mrb[0].mxu0 %v1322
    %v1436 = vpop.f32.mrb[0].mxu0
    %v1437 = vadd.f32 0.0, %v1436
    %v1438 = vpop.f32.mrb[0].mxu0
    %1439 = vmatprep.mubr.f32.mxu0 0.0
    %1440 = vmatmul.mubr.f32.gmra.mrb[0].mxu0 %v1323
    %v1441 = vpop.f32.mrb[0].mxu0
    %v1442 = vadd.f32 0.0, %v1441
    %v1443 = vpop.f32.mrb[0].mxu0
    %1444 = vmatprep.mubr.f32.mxu0 0.0
    %1445 = vmatmul.mubr.f32.gmra.mrb[0].mxu0 %v1324
    %v1446 = vpop.f32.mrb[0].mxu0
    %v1447 = vadd.f32 0.0, %v1446
    %v1448 = vpop.f32.mrb[0].mxu0
    %1449 = vmatprep.mubr.f32.mxu0 0.0
    %1450 = vmatmul.mubr.f32.gmra.mrb[0].mxu0 %v1325
    %v1451 = vpop.f32.mrb[0].mxu0
    %v1452 = vadd.f32 0.0, %v1451
    %v1453 = vpop.f32.mrb[0].mxu0
    %1454 = vmatprep.mubr.f32.mxu0 0.0
    %1455 = vmatmul.mubr.f32.gmra.mrb[0].mxu0 %v1326
    %v1456 = vpop.f32.mrb[0].mxu0
    %v1457 = vadd.f32 0.0, %v1456
    %v1458 = vpop.f32.mrb[0].mxu0
    %1459 = vmatprep.mubr.f32.mxu0 0.0
    %1460 = vmatmul.mubr.f32.gmra.mrb[0].mxu0 %v1327
    %v1461 = vpop.f32.mrb[0].mxu0
    %v1462 = vadd.f32 0.0, %v1461
    %v1463 = vpop.f32.mrb[0].mxu0
    %1464 = vmatprep.mubr.f32.mxu0 0.0
    %1465 = vmatmul.mubr.f32.gmra.mrb[0].mxu0 %v1328
    %v1466 = vpop.f32.mrb[0].mxu0
    %v1467 = vadd.f32 0.0, %v1466
    %v1468 = vpop.f32.mrb[0].mxu0
    %1469 = vmatprep.mubr.f32.mxu0 0.0
    %1470 = vmatmul.mubr.f32.gmra.mrb[0].mxu0 %v1329
    %v1471 = vpop.f32.mrb[0].mxu0
    %v1472 = vadd.f32 0.0, %v1471
    %v1473 = vpop.f32.mrb[0].mxu0
    %1474 = vmatprep.mubr.f32.mxu0 0.0
    %1475 = vmatmul.mubr.f32.gmra.mrb[0].mxu0 %v1330
    %v1476 = vpop.f32.mrb[0].mxu0
    %v1477 = vadd.f32 0.0, %v1476
    %v1478 = vpop.f32.mrb[0].mxu0
    %1479 = vmatprep.mubr.f32.mxu0 0.0
    %1480 = vmatmul.mubr.f32.gmra.mrb[0].mxu0 %v1331
    %v1481 = vpop.f32.mrb[0].mxu0
    %v1482 = vadd.f32 0.0, %v1481
    %v1483 = vpop.f32.mrb[0].mxu0
    %1484 = vmatprep.mubr.f32.mxu0 0.0
    %1485 = vmatmul.mubr.f32.gmra.mrb[0].mxu0 %v1332
    %v1486 = vpop.f32.mrb[0].mxu0
    %v1487 = vadd.f32 0.0, %v1486
    %v1488 = vpop.f32.mrb[0].mxu0
    %1489 = vmatprep.mubr.f32.mxu0 0.0
    %1490 = vmatmul.mubr.f32.gmra.mrb[0].mxu0 %v1333
    %v1491 = vpop.f32.mrb[0].mxu0
    %v1492 = vadd.f32 0.0, %v1491
    %v1493 = vpop.f32.mrb[0].mxu0
    %1494 = vmatprep.mubr.f32.mxu0 0.0
    %1495 = vmatmul.mubr.f32.gmra.mrb[0].mxu0 %v1334
    %v1496 = vpop.f32.mrb[0].mxu0
    %v1497 = vadd.f32 0.0, %v1496
    %v1498 = vpop.f32.mrb[0].mxu0
    %1499 = vmatprep.mubr.f32.mxu0 0.0
    %1500 = vmatmul.mubr.f32.gmra.mrb[0].mxu0 %v1335
    %v1501 = vpop.f32.mrb[0].mxu0
    %v1502 = vadd.f32 0.0, %v1501
    %v1503 = vpop.f32.mrb[0].mxu0
    %1504 = vmatprep.mubr.f32.mxu0 0.0
    %1505 = vmatmul.mubr.f32.gmra.mrb[0].mxu0 %v1336
    %v1506 = vpop.f32.mrb[0].mxu0
    %v1507 = vadd.f32 0.0, %v1506
    %v1508 = vpop.f32.mrb[0].mxu0
    %1509 = vdwg.mxu0
    %v1510 = vadd.f32 %v1223, %v1422
    %v1511 = vadd.f32 %v1224, %v1427
    %v1512 = vadd.f32 %v1225, %v1432
    %v1513 = vadd.f32 %v1226, %v1437
    %v1514 = vadd.f32 %v1227, %v1442
    %v1515 = vadd.f32 %v1228, %v1447
    %v1516 = vadd.f32 %v1229, %v1452
    %v1517 = vadd.f32 %v1230, %v1457
    %v1518 = vadd.f32 %v1231, %v1462
    %v1519 = vadd.f32 %v1232, %v1467
    %v1520 = vadd.f32 %v1233, %v1472
    %v1521 = vadd.f32 %v1234, %v1477
    %v1522 = vadd.f32 %v1235, %v1482
    %v1523 = vadd.f32 %v1236, %v1487
    %v1524 = vadd.f32 %v1237, %v1492
    %v1525 = vadd.f32 %v1238, %v1497
    %v1526 = vadd.f32 %v1239, %v1502
    %v1527 = vadd.f32 %v1240, %v1507
    %s1528 = scalar_lea.vmem [#allocation2], 80
    %v1529 = vld [vmem:[%s1528] sm:$0xff]
    %v1530 = vld [vmem:[%s1528 + $0x8] sm:$0xf]
    %v1531 = vld [vmem:[%s1528 + $0x10] sm:$0xff]
    %v1532 = vld [vmem:[%s1528 + $0x18] sm:$0xf]
    %v1533 = vld [vmem:[%s1528 + $0x20] sm:$0xff]
    %v1534 = vld [vmem:[%s1528 + $0x28] sm:$0xf]
    %v1535 = vld [vmem:[%s1528 + $0x30] sm:$0xff]
    %v1536 = vld [vmem:[%s1528 + $0x38] sm:$0xf]
    %v1537 = vld [vmem:[%s1528 + $0x40] sm:$0xff]
    %v1538 = vld [vmem:[%s1528 + $0x48] sm:$0xf]
    %v1539 = vld [vmem:[%s1528 + $0x50] sm:$0xff]
    %v1540 = vld [vmem:[%s1528 + $0x58] sm:$0xf]
    %v1541 = vld [vmem:[%s1528 + $0x60] sm:$0xff]
    %v1542 = vld [vmem:[%s1528 + $0x68] sm:$0xf]
    %v1543 = vld [vmem:[%s1528 + $0x70] sm:$0xff]
    %v1544 = vld [vmem:[%s1528 + $0x78] sm:$0xf]
    %v1545 = vld [vmem:[%s1528 + $0x80] sm:$0xff]
    %v1546 = vld [vmem:[%s1528 + $0x88] sm:$0xf]
    %v1547 = vld [vmem:[%s1528 + $0x90] sm:$0xff]
    %v1548 = vld [vmem:[%s1528 + $0x98] sm:$0xf]
    %v1549 = vld [vmem:[%s1528 + $0xa0] sm:$0xff]
    %v1550 = vld [vmem:[%s1528 + $0xa8] sm:$0xf]
    %v1551 = vld [vmem:[%s1528 + $0xb0] sm:$0xff]
    %v1552 = vld [vmem:[%s1528 + $0xb8] sm:$0xf]
    %v1577 = vcombine.high %v1529, %v1529
    %v1578 = vcombine.high %v1531, %v1531
    %v1579 = vcombine.high %v1533, %v1533
    %v1580 = vcombine.high %v1535, %v1535
    %v1581 = vcombine.high %v1537, %v1537
    %v1582 = vcombine.high %v1539, %v1539
    %v1583 = vcombine.high %v1541, %v1541
    %v1584 = vcombine.high %v1543, %v1543
    %v1585 = vcombine.high %v1545, %v1545
    %v1586 = vcombine.high %v1547, %v1547
    %v1587 = vcombine.high %v1549, %v1549
    %v1588 = vcombine.high %v1551, %v1551
    %s1589 = scalar_lea.vmem [#allocation6], 640
    %v1590 = vld [vmem:[%s1589] sm:$0xff]
    %v1591 = vld [vmem:[%s1589 + $0x8] sm:$0xff]
    %v1592 = vld [vmem:[%s1589 + $0x10] sm:$0xff]
    %v1593 = vld [vmem:[%s1589 + $0x18] sm:$0xff]
    %v1594 = vld [vmem:[%s1589 + $0x20] sm:$0xff]
    %v1595 = vld [vmem:[%s1589 + $0x28] sm:$0xff]
    %v1596 = vld [vmem:[%s1589 + $0x30] sm:$0xff]
    %v1597 = vld [vmem:[%s1589 + $0x38] sm:$0xff]
    %v1598 = vld [vmem:[%s1589 + $0x40] sm:$0xff]
    %v1599 = vld [vmem:[%s1589 + $0x48] sm:$0xff]
    %v1600 = vld [vmem:[%s1589 + $0x50] sm:$0xff]
    %v1601 = vld [vmem:[%s1589 + $0x58] sm:$0xff]
    %v1602 = vld [vmem:[%s1589 + $0x60] sm:$0xff]
    %v1603 = vld [vmem:[%s1589 + $0x68] sm:$0xff]
    %v1604 = vld [vmem:[%s1589 + $0x70] sm:$0xff]
    %v1605 = vld [vmem:[%s1589 + $0x78] sm:$0xff]
    %v1606 = vcombine.low %v1529, %v1577
    %v1607 = vcombine.low %v1530, %v1531
    %v1608 = vcombine.low %v1578, %v1532
    %v1609 = vcombine.low %v1533, %v1579
    %v1610 = vcombine.low %v1534, %v1535
    %v1611 = vcombine.low %v1580, %v1536
    %v1612 = vcombine.low %v1537, %v1581
    %v1613 = vcombine.low %v1538, %v1539
    %v1614 = vcombine.low %v1582, %v1540
    %v1615 = vcombine.low %v1541, %v1583
    %v1616 = vcombine.low %v1542, %v1543
    %v1617 = vcombine.low %v1584, %v1544
    %v1618 = vcombine.low %v1545, %v1585
    %v1619 = vcombine.low %v1546, %v1547
    %v1620 = vcombine.low %v1586, %v1548
    %v1621 = vcombine.low %v1549, %v1587
    %v1622 = vcombine.low %v1550, %v1551
    %v1623 = vcombine.low %v1588, %v1552
    %1642 = vmatprep.subr.mxu0 0.0
    %1643 = vmatpush1.msra.mxu0 %v1590
    %1644 = vmatprep.subr.mxu0 0.0
    %1645 = vmatpush1.msra.mxu0 %v1591
    %1646 = vmatprep.subr.mxu0 0.0
    %1647 = vmatpush1.msra.mxu0 %v1592
    %1648 = vmatprep.subr.mxu0 0.0
    %1649 = vmatpush1.msra.mxu0 %v1593
    %1650 = vmatprep.subr.mxu0 0.0
    %1651 = vmatpush1.msra.mxu0 %v1594
    %1652 = vmatprep.subr.mxu0 0.0
    %1653 = vmatpush1.msra.mxu0 %v1595
    %1654 = vmatprep.subr.mxu0 0.0
    %1655 = vmatpush1.msra.mxu0 %v1596
    %1656 = vmatprep.subr.mxu0 0.0
    %1657 = vmatpush1.msra.mxu0 %v1597
    %1658 = vmatprep.subr.mxu0 0.0
    %1659 = vmatpush1.msra.mxu0 %v1598
    %1660 = vmatprep.subr.mxu0 0.0
    %1661 = vmatpush1.msra.mxu0 %v1599
    %1662 = vmatprep.subr.mxu0 0.0
    %1663 = vmatpush1.msra.mxu0 %v1600
    %1664 = vmatprep.subr.mxu0 0.0
    %1665 = vmatpush1.msra.mxu0 %v1601
    %1666 = vmatprep.subr.mxu0 0.0
    %1667 = vmatpush1.msra.mxu0 %v1602
    %1668 = vmatprep.subr.mxu0 0.0
    %1669 = vmatpush1.msra.mxu0 %v1603
    %1670 = vmatprep.subr.mxu0 0.0
    %1671 = vmatpush1.msra.mxu0 %v1604
    %1672 = vmatprep.subr.mxu0 0.0
    %1673 = vmatpush1.msra.mxu0 %v1605
    %1674 = vmatprep.subr.mxu0 0.0
    %1675 = vmatpush1.msra.mxu0 0.0
    %1676 = vmatprep.subr.mxu0 0.0
    %1677 = vmatpush1.msra.mxu0 0.0
    %1678 = vmatprep.subr.mxu0 0.0
    %1679 = vmatpush1.msra.mxu0 0.0
    %1680 = vmatprep.subr.mxu0 0.0
    %1681 = vmatpush1.msra.mxu0 0.0
    %1682 = vmatprep.subr.mxu0 0.0
    %1683 = vmatpush1.msra.mxu0 0.0
    %1684 = vmatprep.subr.mxu0 0.0
    %1685 = vmatpush1.msra.mxu0 0.0
    %1686 = vmatprep.subr.mxu0 0.0
    %1687 = vmatpush1.msra.mxu0 0.0
    %1688 = vmatprep.subr.mxu0 0.0
    %1689 = vmatpush1.msra.mxu0 0.0
    %1690 = vmatprep.subr.mxu0 0.0
    %1691 = vmatpush1.msra.mxu0 0.0
    %1692 = vmatprep.subr.mxu0 0.0
    %1693 = vmatpush1.msra.mxu0 0.0
    %1694 = vmatprep.subr.mxu0 0.0
    %1695 = vmatpush1.msra.mxu0 0.0
    %1696 = vmatprep.subr.mxu0 0.0
    %1697 = vmatpush1.msra.mxu0 0.0
    %1698 = vmatprep.subr.mxu0 0.0
    %1699 = vmatpush1.msra.mxu0 0.0
    %1700 = vmatprep.subr.mxu0 0.0
    %1701 = vmatpush1.msra.mxu0 0.0
    %1702 = vmatprep.subr.mxu0 0.0
    %1703 = vmatpush1.msra.mxu0 0.0
    %1704 = vmatprep.subr.mxu0 0.0
    %1705 = vmatpush1.msra.mxu0 0.0
    %1706 = vmatprep.mubr.f32.mxu0 0.0
    %1707 = vmatmul.mubr.f32.gmra.mrb[0].mxu0 %v1606
    %v1708 = vpop.f32.mrb[0].mxu0
    %v1709 = vadd.f32 0.0, %v1708
    %v1710 = vpop.f32.mrb[0].mxu0
    %1711 = vmatprep.mubr.f32.mxu0 0.0
    %1712 = vmatmul.mubr.f32.gmra.mrb[0].mxu0 %v1607
    %v1713 = vpop.f32.mrb[0].mxu0
    %v1714 = vadd.f32 0.0, %v1713
    %v1715 = vpop.f32.mrb[0].mxu0
    %1716 = vmatprep.mubr.f32.mxu0 0.0
    %1717 = vmatmul.mubr.f32.gmra.mrb[0].mxu0 %v1608
    %v1718 = vpop.f32.mrb[0].mxu0
    %v1719 = vadd.f32 0.0, %v1718
    %v1720 = vpop.f32.mrb[0].mxu0
    %1721 = vmatprep.mubr.f32.mxu0 0.0
    %1722 = vmatmul.mubr.f32.gmra.mrb[0].mxu0 %v1609
    %v1723 = vpop.f32.mrb[0].mxu0
    %v1724 = vadd.f32 0.0, %v1723
    %v1725 = vpop.f32.mrb[0].mxu0
    %1726 = vmatprep.mubr.f32.mxu0 0.0
    %1727 = vmatmul.mubr.f32.gmra.mrb[0].mxu0 %v1610
    %v1728 = vpop.f32.mrb[0].mxu0
    %v1729 = vadd.f32 0.0, %v1728
    %v1730 = vpop.f32.mrb[0].mxu0
    %1731 = vmatprep.mubr.f32.mxu0 0.0
    %1732 = vmatmul.mubr.f32.gmra.mrb[0].mxu0 %v1611
    %v1733 = vpop.f32.mrb[0].mxu0
    %v1734 = vadd.f32 0.0, %v1733
    %v1735 = vpop.f32.mrb[0].mxu0
    %1736 = vmatprep.mubr.f32.mxu0 0.0
    %1737 = vmatmul.mubr.f32.gmra.mrb[0].mxu0 %v1612
    %v1738 = vpop.f32.mrb[0].mxu0
    %v1739 = vadd.f32 0.0, %v1738
    %v1740 = vpop.f32.mrb[0].mxu0
    %1741 = vmatprep.mubr.f32.mxu0 0.0
    %1742 = vmatmul.mubr.f32.gmra.mrb[0].mxu0 %v1613
    %v1743 = vpop.f32.mrb[0].mxu0
    %v1744 = vadd.f32 0.0, %v1743
    %v1745 = vpop.f32.mrb[0].mxu0
    %1746 = vmatprep.mubr.f32.mxu0 0.0
    %1747 = vmatmul.mubr.f32.gmra.mrb[0].mxu0 %v1614
    %v1748 = vpop.f32.mrb[0].mxu0
    %v1749 = vadd.f32 0.0, %v1748
    %v1750 = vpop.f32.mrb[0].mxu0
    %1751 = vmatprep.mubr.f32.mxu0 0.0
    %1752 = vmatmul.mubr.f32.gmra.mrb[0].mxu0 %v1615
    %v1753 = vpop.f32.mrb[0].mxu0
    %v1754 = vadd.f32 0.0, %v1753
    %v1755 = vpop.f32.mrb[0].mxu0
    %1756 = vmatprep.mubr.f32.mxu0 0.0
    %1757 = vmatmul.mubr.f32.gmra.mrb[0].mxu0 %v1616
    %v1758 = vpop.f32.mrb[0].mxu0
    %v1759 = vadd.f32 0.0, %v1758
    %v1760 = vpop.f32.mrb[0].mxu0
    %1761 = vmatprep.mubr.f32.mxu0 0.0
    %1762 = vmatmul.mubr.f32.gmra.mrb[0].mxu0 %v1617
    %v1763 = vpop.f32.mrb[0].mxu0
    %v1764 = vadd.f32 0.0, %v1763
    %v1765 = vpop.f32.mrb[0].mxu0
    %1766 = vmatprep.mubr.f32.mxu0 0.0
    %1767 = vmatmul.mubr.f32.gmra.mrb[0].mxu0 %v1618
    %v1768 = vpop.f32.mrb[0].mxu0
    %v1769 = vadd.f32 0.0, %v1768
    %v1770 = vpop.f32.mrb[0].mxu0
    %1771 = vmatprep.mubr.f32.mxu0 0.0
    %1772 = vmatmul.mubr.f32.gmra.mrb[0].mxu0 %v1619
    %v1773 = vpop.f32.mrb[0].mxu0
    %v1774 = vadd.f32 0.0, %v1773
    %v1775 = vpop.f32.mrb[0].mxu0
    %1776 = vmatprep.mubr.f32.mxu0 0.0
    %1777 = vmatmul.mubr.f32.gmra.mrb[0].mxu0 %v1620
    %v1778 = vpop.f32.mrb[0].mxu0
    %v1779 = vadd.f32 0.0, %v1778
    %v1780 = vpop.f32.mrb[0].mxu0
    %1781 = vmatprep.mubr.f32.mxu0 0.0
    %1782 = vmatmul.mubr.f32.gmra.mrb[0].mxu0 %v1621
    %v1783 = vpop.f32.mrb[0].mxu0
    %v1784 = vadd.f32 0.0, %v1783
    %v1785 = vpop.f32.mrb[0].mxu0
    %1786 = vmatprep.mubr.f32.mxu0 0.0
    %1787 = vmatmul.mubr.f32.gmra.mrb[0].mxu0 %v1622
    %v1788 = vpop.f32.mrb[0].mxu0
    %v1789 = vadd.f32 0.0, %v1788
    %v1790 = vpop.f32.mrb[0].mxu0
    %1791 = vmatprep.mubr.f32.mxu0 0.0
    %1792 = vmatmul.mubr.f32.gmra.mrb[0].mxu0 %v1623
    %v1793 = vpop.f32.mrb[0].mxu0
    %v1794 = vadd.f32 0.0, %v1793
    %v1795 = vpop.f32.mrb[0].mxu0
    %1796 = vdwg.mxu0
    %v1797 = vadd.f32 %v1510, %v1709
    %v1798 = vadd.f32 %v1511, %v1714
    %v1799 = vadd.f32 %v1512, %v1719
    %v1800 = vadd.f32 %v1513, %v1724
    %v1801 = vadd.f32 %v1514, %v1729
    %v1802 = vadd.f32 %v1515, %v1734
    %v1803 = vadd.f32 %v1516, %v1739
    %v1804 = vadd.f32 %v1517, %v1744
    %v1805 = vadd.f32 %v1518, %v1749
    %v1806 = vadd.f32 %v1519, %v1754
    %v1807 = vadd.f32 %v1520, %v1759
    %v1808 = vadd.f32 %v1521, %v1764
    %v1809 = vadd.f32 %v1522, %v1769
    %v1810 = vadd.f32 %v1523, %v1774
    %v1811 = vadd.f32 %v1524, %v1779
    %v1812 = vadd.f32 %v1525, %v1784
    %v1813 = vadd.f32 %v1526, %v1789
    %v1814 = vadd.f32 %v1527, %v1794
    %s1815 = scalar_lea.vmem [#allocation2], 96
    %v1816 = vld [vmem:[%s1815] sm:$0xff]
    %v1817 = vld [vmem:[%s1815 + $0x8] sm:$0xf]
    %v1818 = vld [vmem:[%s1815 + $0x10] sm:$0xff]
    %v1819 = vld [vmem:[%s1815 + $0x18] sm:$0xf]
    %v1820 = vld [vmem:[%s1815 + $0x20] sm:$0xff]
    %v1821 = vld [vmem:[%s1815 + $0x28] sm:$0xf]
    %v1822 = vld [vmem:[%s1815 + $0x30] sm:$0xff]
    %v1823 = vld [vmem:[%s1815 + $0x38] sm:$0xf]
    %v1824 = vld [vmem:[%s1815 + $0x40] sm:$0xff]
    %v1825 = vld [vmem:[%s1815 + $0x48] sm:$0xf]
    %v1826 = vld [vmem:[%s1815 + $0x50] sm:$0xff]
    %v1827 = vld [vmem:[%s1815 + $0x58] sm:$0xf]
    %v1828 = vld [vmem:[%s1815 + $0x60] sm:$0xff]
    %v1829 = vld [vmem:[%s1815 + $0x68] sm:$0xf]
    %v1830 = vld [vmem:[%s1815 + $0x70] sm:$0xff]
    %v1831 = vld [vmem:[%s1815 + $0x78] sm:$0xf]
    %v1832 = vld [vmem:[%s1815 + $0x80] sm:$0xff]
    %v1833 = vld [vmem:[%s1815 + $0x88] sm:$0xf]
    %v1834 = vld [vmem:[%s1815 + $0x90] sm:$0xff]
    %v1835 = vld [vmem:[%s1815 + $0x98] sm:$0xf]
    %v1836 = vld [vmem:[%s1815 + $0xa0] sm:$0xff]
    %v1837 = vld [vmem:[%s1815 + $0xa8] sm:$0xf]
    %v1838 = vld [vmem:[%s1815 + $0xb0] sm:$0xff]
    %v1839 = vld [vmem:[%s1815 + $0xb8] sm:$0xf]
    %v1864 = vcombine.high %v1816, %v1816
    %v1865 = vcombine.high %v1818, %v1818
    %v1866 = vcombine.high %v1820, %v1820
    %v1867 = vcombine.high %v1822, %v1822
    %v1868 = vcombine.high %v1824, %v1824
    %v1869 = vcombine.high %v1826, %v1826
    %v1870 = vcombine.high %v1828, %v1828
    %v1871 = vcombine.high %v1830, %v1830
    %v1872 = vcombine.high %v1832, %v1832
    %v1873 = vcombine.high %v1834, %v1834
    %v1874 = vcombine.high %v1836, %v1836
    %v1875 = vcombine.high %v1838, %v1838
    %s1876 = scalar_lea.vmem [#allocation6], 768
    %v1877 = vld [vmem:[%s1876] sm:$0xff]
    %v1878 = vld [vmem:[%s1876 + $0x8] sm:$0xff]
    %v1879 = vld [vmem:[%s1876 + $0x10] sm:$0xff]
    %v1880 = vld [vmem:[%s1876 + $0x18] sm:$0xff]
    %v1881 = vld [vmem:[%s1876 + $0x20] sm:$0xff]
    %v1882 = vld [vmem:[%s1876 + $0x28] sm:$0xff]
    %v1883 = vld [vmem:[%s1876 + $0x30] sm:$0xff]
    %v1884 = vld [vmem:[%s1876 + $0x38] sm:$0xff]
    %v1885 = vld [vmem:[%s1876 + $0x40] sm:$0xff]
    %v1886 = vld [vmem:[%s1876 + $0x48] sm:$0xff]
    %v1887 = vld [vmem:[%s1876 + $0x50] sm:$0xff]
    %v1888 = vld [vmem:[%s1876 + $0x58] sm:$0xff]
    %v1889 = vld [vmem:[%s1876 + $0x60] sm:$0xff]
    %v1890 = vld [vmem:[%s1876 + $0x68] sm:$0xff]
    %v1891 = vld [vmem:[%s1876 + $0x70] sm:$0xff]
    %v1892 = vld [vmem:[%s1876 + $0x78] sm:$0xff]
    %v1893 = vcombine.low %v1816, %v1864
    %v1894 = vcombine.low %v1817, %v1818
    %v1895 = vcombine.low %v1865, %v1819
    %v1896 = vcombine.low %v1820, %v1866
    %v1897 = vcombine.low %v1821, %v1822
    %v1898 = vcombine.low %v1867, %v1823
    %v1899 = vcombine.low %v1824, %v1868
    %v1900 = vcombine.low %v1825, %v1826
    %v1901 = vcombine.low %v1869, %v1827
    %v1902 = vcombine.low %v1828, %v1870
    %v1903 = vcombine.low %v1829, %v1830
    %v1904 = vcombine.low %v1871, %v1831
    %v1905 = vcombine.low %v1832, %v1872
    %v1906 = vcombine.low %v1833, %v1834
    %v1907 = vcombine.low %v1873, %v1835
    %v1908 = vcombine.low %v1836, %v1874
    %v1909 = vcombine.low %v1837, %v1838
    %v1910 = vcombine.low %v1875, %v1839
    %1929 = vmatprep.subr.mxu0 0.0
    %1930 = vmatpush1.msra.mxu0 %v1877
    %1931 = vmatprep.subr.mxu0 0.0
    %1932 = vmatpush1.msra.mxu0 %v1878
    %1933 = vmatprep.subr.mxu0 0.0
    %1934 = vmatpush1.msra.mxu0 %v1879
    %1935 = vmatprep.subr.mxu0 0.0
    %1936 = vmatpush1.msra.mxu0 %v1880
    %1937 = vmatprep.subr.mxu0 0.0
    %1938 = vmatpush1.msra.mxu0 %v1881
    %1939 = vmatprep.subr.mxu0 0.0
    %1940 = vmatpush1.msra.mxu0 %v1882
    %1941 = vmatprep.subr.mxu0 0.0
    %1942 = vmatpush1.msra.mxu0 %v1883
    %1943 = vmatprep.subr.mxu0 0.0
    %1944 = vmatpush1.msra.mxu0 %v1884
    %1945 = vmatprep.subr.mxu0 0.0
    %1946 = vmatpush1.msra.mxu0 %v1885
    %1947 = vmatprep.subr.mxu0 0.0
    %1948 = vmatpush1.msra.mxu0 %v1886
    %1949 = vmatprep.subr.mxu0 0.0
    %1950 = vmatpush1.msra.mxu0 %v1887
    %1951 = vmatprep.subr.mxu0 0.0
    %1952 = vmatpush1.msra.mxu0 %v1888
    %1953 = vmatprep.subr.mxu0 0.0
    %1954 = vmatpush1.msra.mxu0 %v1889
    %1955 = vmatprep.subr.mxu0 0.0
    %1956 = vmatpush1.msra.mxu0 %v1890
    %1957 = vmatprep.subr.mxu0 0.0
    %1958 = vmatpush1.msra.mxu0 %v1891
    %1959 = vmatprep.subr.mxu0 0.0
    %1960 = vmatpush1.msra.mxu0 %v1892
    %1961 = vmatprep.subr.mxu0 0.0
    %1962 = vmatpush1.msra.mxu0 0.0
    %1963 = vmatprep.subr.mxu0 0.0
    %1964 = vmatpush1.msra.mxu0 0.0
    %1965 = vmatprep.subr.mxu0 0.0
    %1966 = vmatpush1.msra.mxu0 0.0
    %1967 = vmatprep.subr.mxu0 0.0
    %1968 = vmatpush1.msra.mxu0 0.0
    %1969 = vmatprep.subr.mxu0 0.0
    %1970 = vmatpush1.msra.mxu0 0.0
    %1971 = vmatprep.subr.mxu0 0.0
    %1972 = vmatpush1.msra.mxu0 0.0
    %1973 = vmatprep.subr.mxu0 0.0
    %1974 = vmatpush1.msra.mxu0 0.0
    %1975 = vmatprep.subr.mxu0 0.0
    %1976 = vmatpush1.msra.mxu0 0.0
    %1977 = vmatprep.subr.mxu0 0.0
    %1978 = vmatpush1.msra.mxu0 0.0
    %1979 = vmatprep.subr.mxu0 0.0
    %1980 = vmatpush1.msra.mxu0 0.0
    %1981 = vmatprep.subr.mxu0 0.0
    %1982 = vmatpush1.msra.mxu0 0.0
    %1983 = vmatprep.subr.mxu0 0.0
    %1984 = vmatpush1.msra.mxu0 0.0
    %1985 = vmatprep.subr.mxu0 0.0
    %1986 = vmatpush1.msra.mxu0 0.0
    %1987 = vmatprep.subr.mxu0 0.0
    %1988 = vmatpush1.msra.mxu0 0.0
    %1989 = vmatprep.subr.mxu0 0.0
    %1990 = vmatpush1.msra.mxu0 0.0
    %1991 = vmatprep.subr.mxu0 0.0
    %1992 = vmatpush1.msra.mxu0 0.0
    %1993 = vmatprep.mubr.f32.mxu0 0.0
    %1994 = vmatmul.mubr.f32.gmra.mrb[0].mxu0 %v1893
    %v1995 = vpop.f32.mrb[0].mxu0
    %v1996 = vadd.f32 0.0, %v1995
    %v1997 = vpop.f32.mrb[0].mxu0
    %1998 = vmatprep.mubr.f32.mxu0 0.0
    %1999 = vmatmul.mubr.f32.gmra.mrb[0].mxu0 %v1894
    %v2000 = vpop.f32.mrb[0].mxu0
    %v2001 = vadd.f32 0.0, %v2000
    %v2002 = vpop.f32.mrb[0].mxu0
    %2003 = vmatprep.mubr.f32.mxu0 0.0
    %2004 = vmatmul.mubr.f32.gmra.mrb[0].mxu0 %v1895
    %v2005 = vpop.f32.mrb[0].mxu0
    %v2006 = vadd.f32 0.0, %v2005
    %v2007 = vpop.f32.mrb[0].mxu0
    %2008 = vmatprep.mubr.f32.mxu0 0.0
    %2009 = vmatmul.mubr.f32.gmra.mrb[0].mxu0 %v1896
    %v2010 = vpop.f32.mrb[0].mxu0
    %v2011 = vadd.f32 0.0, %v2010
    %v2012 = vpop.f32.mrb[0].mxu0
    %2013 = vmatprep.mubr.f32.mxu0 0.0
    %2014 = vmatmul.mubr.f32.gmra.mrb[0].mxu0 %v1897
    %v2015 = vpop.f32.mrb[0].mxu0
    %v2016 = vadd.f32 0.0, %v2015
    %v2017 = vpop.f32.mrb[0].mxu0
    %2018 = vmatprep.mubr.f32.mxu0 0.0
    %2019 = vmatmul.mubr.f32.gmra.mrb[0].mxu0 %v1898
    %v2020 = vpop.f32.mrb[0].mxu0
    %v2021 = vadd.f32 0.0, %v2020
    %v2022 = vpop.f32.mrb[0].mxu0
    %2023 = vmatprep.mubr.f32.mxu0 0.0
    %2024 = vmatmul.mubr.f32.gmra.mrb[0].mxu0 %v1899
    %v2025 = vpop.f32.mrb[0].mxu0
    %v2026 = vadd.f32 0.0, %v2025
    %v2027 = vpop.f32.mrb[0].mxu0
    %2028 = vmatprep.mubr.f32.mxu0 0.0
    %2029 = vmatmul.mubr.f32.gmra.mrb[0].mxu0 %v1900
    %v2030 = vpop.f32.mrb[0].mxu0
    %v2031 = vadd.f32 0.0, %v2030
    %v2032 = vpop.f32.mrb[0].mxu0
    %2033 = vmatprep.mubr.f32.mxu0 0.0
    %2034 = vmatmul.mubr.f32.gmra.mrb[0].mxu0 %v1901
    %v2035 = vpop.f32.mrb[0].mxu0
    %v2036 = vadd.f32 0.0, %v2035
    %v2037 = vpop.f32.mrb[0].mxu0
    %2038 = vmatprep.mubr.f32.mxu0 0.0
    %2039 = vmatmul.mubr.f32.gmra.mrb[0].mxu0 %v1902
    %v2040 = vpop.f32.mrb[0].mxu0
    %v2041 = vadd.f32 0.0, %v2040
    %v2042 = vpop.f32.mrb[0].mxu0
    %2043 = vmatprep.mubr.f32.mxu0 0.0
    %2044 = vmatmul.mubr.f32.gmra.mrb[0].mxu0 %v1903
    %v2045 = vpop.f32.mrb[0].mxu0
    %v2046 = vadd.f32 0.0, %v2045
    %v2047 = vpop.f32.mrb[0].mxu0
    %2048 = vmatprep.mubr.f32.mxu0 0.0
    %2049 = vmatmul.mubr.f32.gmra.mrb[0].mxu0 %v1904
    %v2050 = vpop.f32.mrb[0].mxu0
    %v2051 = vadd.f32 0.0, %v2050
    %v2052 = vpop.f32.mrb[0].mxu0
    %2053 = vmatprep.mubr.f32.mxu0 0.0
    %2054 = vmatmul.mubr.f32.gmra.mrb[0].mxu0 %v1905
    %v2055 = vpop.f32.mrb[0].mxu0
    %v2056 = vadd.f32 0.0, %v2055
    %v2057 = vpop.f32.mrb[0].mxu0
    %2058 = vmatprep.mubr.f32.mxu0 0.0
    %2059 = vmatmul.mubr.f32.gmra.mrb[0].mxu0 %v1906
    %v2060 = vpop.f32.mrb[0].mxu0
    %v2061 = vadd.f32 0.0, %v2060
    %v2062 = vpop.f32.mrb[0].mxu0
    %2063 = vmatprep.mubr.f32.mxu0 0.0
    %2064 = vmatmul.mubr.f32.gmra.mrb[0].mxu0 %v1907
    %v2065 = vpop.f32.mrb[0].mxu0
    %v2066 = vadd.f32 0.0, %v2065
    %v2067 = vpop.f32.mrb[0].mxu0
    %2068 = vmatprep.mubr.f32.mxu0 0.0
    %2069 = vmatmul.mubr.f32.gmra.mrb[0].mxu0 %v1908
    %v2070 = vpop.f32.mrb[0].mxu0
    %v2071 = vadd.f32 0.0, %v2070
    %v2072 = vpop.f32.mrb[0].mxu0
    %2073 = vmatprep.mubr.f32.mxu0 0.0
    %2074 = vmatmul.mubr.f32.gmra.mrb[0].mxu0 %v1909
    %v2075 = vpop.f32.mrb[0].mxu0
    %v2076 = vadd.f32 0.0, %v2075
    %v2077 = vpop.f32.mrb[0].mxu0
    %2078 = vmatprep.mubr.f32.mxu0 0.0
    %2079 = vmatmul.mubr.f32.gmra.mrb[0].mxu0 %v1910
    %v2080 = vpop.f32.mrb[0].mxu0
    %v2081 = vadd.f32 0.0, %v2080
    %v2082 = vpop.f32.mrb[0].mxu0
    %2083 = vdwg.mxu0
    %v2084 = vadd.f32 %v1797, %v1996
    %v2085 = vadd.f32 %v1798, %v2001
    %v2086 = vadd.f32 %v1799, %v2006
    %v2087 = vadd.f32 %v1800, %v2011
    %v2088 = vadd.f32 %v1801, %v2016
    %v2089 = vadd.f32 %v1802, %v2021
    %v2090 = vadd.f32 %v1803, %v2026
    %v2091 = vadd.f32 %v1804, %v2031
    %v2092 = vadd.f32 %v1805, %v2036
    %v2093 = vadd.f32 %v1806, %v2041
    %v2094 = vadd.f32 %v1807, %v2046
    %v2095 = vadd.f32 %v1808, %v2051
    %v2096 = vadd.f32 %v1809, %v2056
    %v2097 = vadd.f32 %v1810, %v2061
    %v2098 = vadd.f32 %v1811, %v2066
    %v2099 = vadd.f32 %v1812, %v2071
    %v2100 = vadd.f32 %v1813, %v2076
    %v2101 = vadd.f32 %v1814, %v2081
    %v2102 = vadd.f32 %v2084, %v2085
    %v2103 = vadd.f32 %v2102, %v2086
    %v2104 = vadd.f32 %v2103, %v2087
    %v2105 = vadd.f32 %v2104, %v2088
    %v2106 = vadd.f32 %v2105, %v2089
    %v2107 = vadd.f32 %v2106, %v2090
    %v2108 = vadd.f32 %v2107, %v2091
    %v2109 = vadd.f32 %v2108, %v2092
    %v2110 = vadd.f32 %v2109, %v2093
    %v2111 = vadd.f32 %v2110, %v2094
    %v2112 = vadd.f32 %v2111, %v2095
    %v2113 = vadd.f32 %v2112, %v2096
    %v2114 = vadd.f32 %v2113, %v2097
    %v2115 = vadd.f32 %v2114, %v2098
    %v2116 = vadd.f32 %v2115, %v2099
    %v2117 = vadd.f32 %v2116, %v2100
    %v2118 = vadd.f32 %v2117, %v2101
    %v2119 = vrot.slane %v2118, 4
    %v2120 = vadd.f32 %v2118, %v2119
    %v2121 = vrot.slane %v2120, 2
    %v2122 = vadd.f32 %v2120, %v2121
    %v2123 = vrot.slane %v2122, 1
    %v2124 = vadd.f32 %v2122, %v2123
    %v2125 = vmul.f32 %v2084, %v2084
    %v2126 = vmul.f32 %v2085, %v2085
    %v2127 = vmul.f32 %v2086, %v2086
    %v2128 = vmul.f32 %v2087, %v2087
    %v2129 = vmul.f32 %v2088, %v2088
    %v2130 = vmul.f32 %v2089, %v2089
    %v2131 = vmul.f32 %v2090, %v2090
    %v2132 = vmul.f32 %v2091, %v2091
    %v2133 = vmul.f32 %v2092, %v2092
    %v2134 = vmul.f32 %v2093, %v2093
    %v2135 = vmul.f32 %v2094, %v2094
    %v2136 = vmul.f32 %v2095, %v2095
    %v2137 = vmul.f32 %v2096, %v2096
    %v2138 = vmul.f32 %v2097, %v2097
    %v2139 = vmul.f32 %v2098, %v2098
    %v2140 = vmul.f32 %v2099, %v2099
    %v2141 = vmul.f32 %v2100, %v2100
    %v2142 = vmul.f32 %v2101, %v2101
    %v2143 = vadd.f32 %v2125, %v2126
    %v2144 = vadd.f32 %v2143, %v2127
    %v2145 = vadd.f32 %v2144, %v2128
    %v2146 = vadd.f32 %v2145, %v2129
    %v2147 = vadd.f32 %v2146, %v2130
    %v2148 = vadd.f32 %v2147, %v2131
    %v2149 = vadd.f32 %v2148, %v2132
    %v2150 = vadd.f32 %v2149, %v2133
    %v2151 = vadd.f32 %v2150, %v2134
    %v2152 = vadd.f32 %v2151, %v2135
    %v2153 = vadd.f32 %v2152, %v2136
    %v2154 = vadd.f32 %v2153, %v2137
    %v2155 = vadd.f32 %v2154, %v2138
    %v2156 = vadd.f32 %v2155, %v2139
    %v2157 = vadd.f32 %v2156, %v2140
    %v2158 = vadd.f32 %v2157, %v2141
    %v2159 = vadd.f32 %v2158, %v2142
    %v2160 = vrot.slane %v2159, 4
    %v2161 = vadd.f32 %v2159, %v2160
    %v2162 = vrot.slane %v2161, 2
    %v2163 = vadd.f32 %v2161, %v2162
    %v2164 = vrot.slane %v2163, 1
    %v2165 = vadd.f32 %v2163, %v2164
    %v2166 = vmul.f32 %v2124, 0.0069444445
    %v2167 = vmul.f32 %v2165, 0.0069444445
    %v2168 = vmul.f32 %v2166, %v2166
    %v2169 = vsub.f32 %v2167, %v2168
    %v2170 = vld [vmem:[%s2] sm:$0x1]
    %v2171 = vadd.f32 %v2169, 0.001
    %v2172 = vrsqrt.pop %v2171
    %v2173 = vmul.f32 %v2170, %v2172
    %v2174 = vld [vmem:[%s3] sm:$0x1]
    %v2175 = vmul.f32 %v2166, %v2173
    %v2176 = vsub.f32 %v2174, %v2175
    %v2178 = vlaneseq
    %v2179 = vshrl.u32 %v2178, 7
    %v2180 = vsub.s32 0, %v2179
    %v2181 = vrot.slane %v2173, %v2180
    %v2183 = vmul.f32 %v2084, %v2181
    %v2184 = vmul.f32 %v2085, %v2181
    %v2185 = vmul.f32 %v2086, %v2181
    %v2186 = vmul.f32 %v2087, %v2181
    %v2187 = vmul.f32 %v2088, %v2181
    %v2188 = vmul.f32 %v2089, %v2181
    %v2189 = vmul.f32 %v2090, %v2181
    %v2190 = vmul.f32 %v2091, %v2181
    %v2191 = vmul.f32 %v2092, %v2181
    %v2192 = vmul.f32 %v2093, %v2181
    %v2193 = vmul.f32 %v2094, %v2181
    %v2194 = vmul.f32 %v2095, %v2181
    %v2195 = vmul.f32 %v2096, %v2181
    %v2196 = vmul.f32 %v2097, %v2181
    %v2197 = vmul.f32 %v2098, %v2181
    %v2198 = vmul.f32 %v2099, %v2181
    %v2199 = vmul.f32 %v2100, %v2181
    %v2200 = vmul.f32 %v2101, %v2181
    %v2202 = vlaneseq
    %v2203 = vshrl.u32 %v2202, 7
    %v2204 = vsub.s32 0, %v2203
    %v2205 = vrot.slane %v2176, %v2204
    %v2207 = vadd.f32 %v2183, %v2205
    %v2208 = vadd.f32 %v2184, %v2205
    %v2209 = vadd.f32 %v2185, %v2205
    %v2210 = vadd.f32 %v2186, %v2205
    %v2211 = vadd.f32 %v2187, %v2205
    %v2212 = vadd.f32 %v2188, %v2205
    %v2213 = vadd.f32 %v2189, %v2205
    %v2214 = vadd.f32 %v2190, %v2205
    %v2215 = vadd.f32 %v2191, %v2205
    %v2216 = vadd.f32 %v2192, %v2205
    %v2217 = vadd.f32 %v2193, %v2205
    %v2218 = vadd.f32 %v2194, %v2205
    %v2219 = vadd.f32 %v2195, %v2205
    %v2220 = vadd.f32 %v2196, %v2205
    %v2221 = vadd.f32 %v2197, %v2205
    %v2222 = vadd.f32 %v2198, %v2205
    %v2223 = vadd.f32 %v2199, %v2205
    %v2224 = vadd.f32 %v2200, %v2205
    %v2243 = vcombine.high %v2207, %v2207
    %v2244 = vcombine.high %v2208, %v2208
    %v2245 = vcombine.high %v2209, %v2209
    %v2246 = vcombine.high %v2210, %v2210
    %v2247 = vcombine.high %v2211, %v2211
    %v2248 = vcombine.high %v2212, %v2212
    %v2249 = vcombine.high %v2213, %v2213
    %v2250 = vcombine.high %v2214, %v2214
    %v2251 = vcombine.high %v2215, %v2215
    %v2252 = vcombine.high %v2216, %v2216
    %v2253 = vcombine.high %v2217, %v2217
    %v2254 = vcombine.high %v2218, %v2218
    %v2255 = vcombine.high %v2219, %v2219
    %v2256 = vcombine.high %v2220, %v2220
    %v2257 = vcombine.high %v2221, %v2221
    %v2258 = vcombine.high %v2222, %v2222
    %v2259 = vcombine.high %v2223, %v2223
    %v2260 = vcombine.high %v2224, %v2224
    %v2267 = vcombine.low %v2207, %v2243
    %v2268 = vcombine.low %v2244, %v2209
    %v2269 = vcombine.low %v2210, %v2246
    %v2270 = vcombine.low %v2247, %v2212
    %v2271 = vcombine.low %v2213, %v2249
    %v2272 = vcombine.low %v2250, %v2215
    %v2273 = vcombine.low %v2216, %v2252
    %v2274 = vcombine.low %v2253, %v2218
    %v2275 = vcombine.low %v2219, %v2255
    %v2276 = vcombine.low %v2256, %v2221
    %v2277 = vcombine.low %v2222, %v2258
    %v2278 = vcombine.low %v2259, %v2224
    %2291 = vst [vmem:[#allocation8] sm:$0xff] %v2267
    %2292 = vst [vmem:[#allocation8 + $0x8] sm:$0xf] %v2208
    %2293 = vst [vmem:[#allocation8 + $0x10] sm:$0xff] %v2268
    %2294 = vst [vmem:[#allocation8 + $0x18] sm:$0xf] %v2245
    %2295 = vst [vmem:[#allocation8 + $0x20] sm:$0xff] %v2269
    %2296 = vst [vmem:[#allocation8 + $0x28] sm:$0xf] %v2211
    %2297 = vst [vmem:[#allocation8 + $0x30] sm:$0xff] %v2270
    %2298 = vst [vmem:[#allocation8 + $0x38] sm:$0xf] %v2248
    %2299 = vst [vmem:[#allocation8 + $0x40] sm:$0xff] %v2271
    %2300 = vst [vmem:[#allocation8 + $0x48] sm:$0xf] %v2214
    %2301 = vst [vmem:[#allocation8 + $0x50] sm:$0xff] %v2272
    %2302 = vst [vmem:[#allocation8 + $0x58] sm:$0xf] %v2251
    %2303 = vst [vmem:[#allocation8 + $0x60] sm:$0xff] %v2273
    %2304 = vst [vmem:[#allocation8 + $0x68] sm:$0xf] %v2217
    %2305 = vst [vmem:[#allocation8 + $0x70] sm:$0xff] %v2274
    %2306 = vst [vmem:[#allocation8 + $0x78] sm:$0xf] %v2254
    %2307 = vst [vmem:[#allocation8 + $0x80] sm:$0xff] %v2275
    %2308 = vst [vmem:[#allocation8 + $0x88] sm:$0xf] %v2220
    %2309 = vst [vmem:[#allocation8 + $0x90] sm:$0xff] %v2276
    %2310 = vst [vmem:[#allocation8 + $0x98] sm:$0xf] %v2257
    %2311 = vst [vmem:[#allocation8 + $0xa0] sm:$0xff] %v2277
    %2312 = vst [vmem:[#allocation8 + $0xa8] sm:$0xf] %v2223
    %2313 = vst [vmem:[#allocation8 + $0xb0] sm:$0xff] %v2278
    %2314 = vst [vmem:[#allocation8 + $0xb8] sm:$0xf] %v2260
    // Predicated region
    $region26: #{tpu_custom_call.1} parent=1 // pred_check
      _
    $region27: #{tpu_custom_call.1} parent=1 // pred_check_branch
      %2316 = sbr.rel (0) target = $region29
    $region28: #{tpu_custom_call.1} parent=1 // pred_region
      %s2318 = ssub.s32 3072, 3072
      %2319 = vsyncadd [#allocation5], %s2318
      %s2320 = sshll.u32 [#allocation8], 4
      %s2321 = int_to_ptr.vmem [resolvable:$true] %s2320
      %2326 = dma.vmem_to_hbm [thread:$0]  %s2321, 3072, %s4, [#allocation5], 128, 128, 8
    $region29: #{tpu_custom_call.1} parent=1 // pred_fallthru
      _
    // Predicated region
    $region30: #{tpu_custom_call.1} parent=1 // pred_check
      _
    $region31: #{tpu_custom_call.1} parent=1 // pred_check_branch
      %2328 = sbr.rel (0) target = $region33
    $region32: #{tpu_custom_call.1} parent=1 // pred_region
      %2329 = dma.done [#allocation5], 3072
    $region33: #{tpu_custom_call.1} parent=1 // pred_fallthru
      _
    %2330 = vsyncpa [#allocation4], 1
    %2331 = vsyncpa [#allocation7], 1
    %2332 = vsyncpa [#allocation5], 1

</llo_original>
